<compile_context>
chip_gen: v6e
topology: v6e:2x2x1
jax: 0.10.0
libtpu: 0.0.40
codegen_flags: <defaults>
</compile_context>

<pallas_src>
import functools

import jax
import jax.numpy as jnp
from jax import lax
from jax.experimental import pallas as pl
from jax.experimental.pallas import tpu as pltpu


_NEG_BIG = -1e30  # finite "minus infinity" (avoids -inf arithmetic edge cases)


# ----------------------------- Pallas kernel -------------------------------- #

def _flash_causal_kernel(qi_ref, ki_ref, q_ref, k_ref, v_ref, o_ref,
                         m_sc, l_sc, acc_sc, *, heads, dim_head, tile):
    """One (batch, packed-step) grid point.

    q_ref/k_ref/v_ref/o_ref : (tile, heads*dim_head) bf16 tiles (all heads, lane-dense).
    m_sc/l_sc               : (heads, tile, 1) f32 running max / denominator.
    acc_sc                  : (tile, heads*dim_head) f32 output accumulator.
    qi_ref/ki_ref           : SMEM int32 arrays driving the packed (qi, ki) schedule.
    """
    s_idx = pl.program_id(1)
    qi = qi_ref[s_idx]          # q-tile index for this packed step
    ki = ki_ref[s_idx]          # kv-tile index, 0 <= ki <= qi

    @pl.when(ki == 0)
    def _init():
        m_sc[...] = jnp.full(m_sc.shape, _NEG_BIG, m_sc.dtype)
        l_sc[...] = jnp.zeros(l_sc.shape, l_sc.dtype)
        acc_sc[...] = jnp.zeros(acc_sc.shape, acc_sc.dtype)

    def _online_softmax_update(masked):
        if masked:
            # Constant local lower-triangle bias (tq == tk); only the diagonal tile
            # pays for it, and it is shared across all heads.
            row = lax.broadcasted_iota(jnp.int32, (tile, tile), 0)
            col = lax.broadcasted_iota(jnp.int32, (tile, tile), 1)
            bias = jnp.where(col > row, jnp.float32(_NEG_BIG), jnp.float32(0.0))
        for h in range(heads):
            sl = slice(h * dim_head, (h + 1) * dim_head)
            q_h = q_ref[:, sl]                              # (tile, Dh) bf16
            k_h = k_ref[:, sl]                              # (tile, Dh) bf16
            v_h = v_ref[:, sl]                              # (tile, Dh) bf16
            # s = q @ k^T without materializing k.T, f32 accumulation on the MXU.
            s = lax.dot_general(
                q_h, k_h, (((1,), (1,)), ((), ())),
                preferred_element_type=jnp.float32)         # (tile, tile) f32
            if masked:
                s = s + bias
            # Online softmax — statistics kept in f32 (v5e has no bf16 VPU/EUP).
            m_prev = m_sc[h]                                              # (tile, 1)
            m_new = jnp.maximum(m_prev, jnp.max(s, axis=-1, keepdims=True))
            alpha = jnp.exp(m_prev - m_new)
            p = jnp.exp(s - m_new)                                        # (tile, tile)
            l_sc[h] = alpha * l_sc[h] + jnp.sum(p, axis=-1, keepdims=True)
            acc_sc[:, sl] = alpha * acc_sc[:, sl] + lax.dot_general(
                p.astype(jnp.bfloat16), v_h, (((1,), (0,)), ((), ())),
                preferred_element_type=jnp.float32)                       # (tile, Dh)
            m_sc[h] = m_new

    @pl.when(ki < qi)
    def _off_diagonal():                       # fully unmasked tile: no mask work
        _online_softmax_update(masked=False)

    @pl.when(ki == qi)
    def _diagonal_and_finalize():              # diagonal tile is also the last one
        _online_softmax_update(masked=True)
        for h in range(heads):
            sl = slice(h * dim_head, (h + 1) * dim_head)
            inv_l = pl.reciprocal(l_sc[h], approx=True)     # EUP slot
            acc_sc[:, sl] = acc_sc[:, sl] * inv_l
        o_ref[...] = acc_sc[...].astype(o_ref.dtype)        # lane-dense bf16 store


# ------------------------------ kernel wrapper ------------------------------- #

def _pick_tile(n, target=256):
    """Largest tile <= target dividing n, preferring multiples of 16 (bf16 sublane
    packing), then multiples of 8, else n itself."""
    if n <= target:
        return n
    for step in (16, 8):
        t = (target // step) * step
        while t >= step:
            if n % t == 0:
                return t
            t -= step
    return n


def causal_attention_pallas(q, k, v, *, heads, dim_head, tile=None):
    """q, k, v: (B, N, heads*dim_head) bf16 (head-major columns).
    Returns causal softmax attention in the same (B, N, heads*dim_head) bf16 layout."""
    B, N, HD = q.shape
    assert HD == heads * dim_head
    t = _pick_tile(N) if tile is None else tile
    assert N % t == 0, "sequence length must be divisible by the tile size"
    nq = N // t

    # Triangular (qi, ki) schedule: only causally-live tile pairs are visited, so
    # fully masked kv tiles pay neither DMA nor grid-step overhead.
    qi_list, ki_list = [], []
    for qi in range(nq):
        for ki in range(qi + 1):
            qi_list.append(qi)
            ki_list.append(ki)
    qi_idx = jnp.asarray(qi_list, jnp.int32)
    ki_idx = jnp.asarray(ki_list, jnp.int32)
    n_steps = len(qi_list)

    def q_map(b, s, qi_r, ki_r):      # prefetch refs arrive as trailing args
        return (b, qi_r[s], 0)

    def kv_map(b, s, qi_r, ki_r):
        return (b, ki_r[s], 0)

    kernel = functools.partial(_flash_causal_kernel,
                               heads=heads, dim_head=dim_head, tile=t)

    # VMEM budget: double-buffered bf16 q/k/v/out tiles + f32 acc/stats + transient
    # (t,t) f32 per head -> a few MiB at t=256, HD=512; well under the 32 MiB scoped
    # default on every generation (incl. v7x's 64 MiB physical VMEM).
    return pl.pallas_call(
        kernel,
        out_shape=jax.ShapeDtypeStruct((B, N, HD), jnp.bfloat16),
        grid_spec=pltpu.PrefetchScalarGridSpec(
            num_scalar_prefetch=2,
            grid=(B, n_steps),                       # packed reduction axis last
            in_specs=[
                pl.BlockSpec((None, t, HD), q_map),   # q: constant per qi -> no re-DMA
                pl.BlockSpec((None, t, HD), kv_map),
                pl.BlockSpec((None, t, HD), kv_map),
            ],
            out_specs=pl.BlockSpec((None, t, HD), q_map),
            scratch_shapes=[
                pltpu.VMEM((heads, t, 1), jnp.float32),   # running row max  m
                pltpu.VMEM((heads, t, 1), jnp.float32),   # running denom    l
                pltpu.VMEM((t, HD), jnp.float32),         # output accumulator
            ],
        ),
        compiler_params=pltpu.CompilerParams(
            # Batch axis shards across TensorCores (v7x has 2 TCs); the packed
            # (qi, ki) axis carries the accumulator so it must stay "arbitrary".
            dimension_semantics=("parallel", "arbitrary"),
        ),
    )(qi_idx, ki_idx, q, k, v)


# --------------------------- Module wrapper (glue) --------------------------- #

class CausalFullAttentionPallas:
    """JAX/Pallas port of gateloop_transformer.CausalFullAttention with default flags:
    rotary_emb=False, add_swish_gating=False, data_dependent_rel_pos=False
    (=> softmax_normalize=True)."""

    def __init__(self, dim, *, dim_head=64, heads=8, key=None):
        self.dim = dim
        self.dim_head = dim_head
        self.heads = heads
        self.dim_inner = dim_head * heads
        self.scale = dim_head ** -0.5

        key = jax.random.PRNGKey(0) if key is None else key
        kq, kk, kv, ko, kb = jax.random.split(key, 5)

        def init(k, shape, fan_in):
            return jax.random.normal(k, shape, jnp.float32) / jnp.sqrt(fan_in)

        # Separate q/k/v projections keep activations in a transpose-free
        # (B, N, heads*dim_head) layout; the softmax scale is folded into w_q
        # (zero runtime cost — replaces the separate `q = q * scale` HBM pass).
        self.w_q = init(kq, (dim, self.dim_inner), dim) * self.scale
        self.w_k = init(kk, (dim, self.dim_inner), dim)
        self.w_v = init(kv, (dim, self.dim_inner), dim)
        self.w_out = init(ko, (self.dim_inner, dim), self.dim_inner)
        self.b_out = jax.random.normal(kb, (dim,), jnp.float32) * 0.01

    def __call__(self, x):
        # x: (B, N, dim).  bf16 casts fuse into the projection epilogues, so the
        # attention kernel streams bf16 and writes bf16 straight into the output
        # projection — no HBM transposes or extra reshapes anywhere.
        q = (x @ self.w_q).astype(jnp.bfloat16)          # (B, N, H*Dh), scale folded
        k = (x @ self.w_k).astype(jnp.bfloat16)
        v = (x @ self.w_v).astype(jnp.bfloat16)
        out = causal_attention_pallas(q, k, v, heads=self.heads, dim_head=self.dim_head)
        return out @ self.w_out + self.b_out             # promotes back to f32


# -------------------------- Pure-JAX reference check ------------------------- #

def _reference_forward(mod: CausalFullAttentionPallas, x):
    B, N, _ = x.shape
    H, Dh = mod.heads, mod.dim_head
    q = (x @ mod.w_q).reshape(B, N, H, Dh).transpose(0, 2, 1, 3)   # scale already folded
    k = (x @ mod.w_k).reshape(B, N, H, Dh).transpose(0, 2, 1, 3)
    v = (x @ mod.w_v).reshape(B, N, H, Dh).transpose(0, 2, 1, 3)
    sim = jnp.einsum('bhid,bhjd->bhij', q, k)
    mask = jnp.triu(jnp.ones((N, N), dtype=bool), k=1)
    sim = jnp.where(mask, _NEG_BIG, sim)
    attn = jax.nn.softmax(sim, axis=-1)
    out = jnp.einsum('bhij,bhjd->bhid', attn, v)
    out = out.transpose(0, 2, 1, 3).reshape(B, N, H * Dh)
    return out @ mod.w_out + mod.b_out


# ----------------------------------- main ------------------------------------ #

if __name__ == "__main__":
    key = jax.random.PRNGKey(0)
    k_x, k_params = jax.random.split(key)

    batch, seq, dim = 2, 16, 32
    heads, dim_head = 2, 16

    x = jax.random.normal(k_x, (batch, seq, dim), jnp.float32)

    module = CausalFullAttentionPallas(dim, dim_head=dim_head, heads=heads, key=k_params)

    y = jax.block_until_ready(module(x))
    y_ref = jax.block_until_ready(_reference_forward(module, x))

    assert y.shape == (batch, seq, dim)
    # bf16 kernel operands / bf16 output vs the pure-f32 reference -> loose tolerance.
    assert jnp.allclose(y, y_ref, atol=4e-2, rtol=4e-2), "mismatch vs pure-JAX reference"

    print("KERNEL_OK")
</pallas_src>

<mosaic_0001>
module attributes {stable_mosaic.version = 11 : i64} {
  func.func @_flash_causal_kernel(%arg0: i32, %arg1: i32, %arg2: memref<1xi32, #tpu.memory_space<smem>>, %arg3: memref<1xi32, #tpu.memory_space<smem>>, %arg4: memref<1x16x32xbf16, #tpu.memory_space<vmem>>, %arg5: memref<1x16x32xbf16, #tpu.memory_space<vmem>>, %arg6: memref<1x16x32xbf16, #tpu.memory_space<vmem>>, %arg7: memref<1x16x32xbf16, #tpu.memory_space<vmem>>, %arg8: memref<2x16x1xf32, #tpu.memory_space<vmem>>, %arg9: memref<2x16x1xf32, #tpu.memory_space<vmem>>, %arg10: memref<16x32xf32, #tpu.memory_space<vmem>>) attributes {dimension_semantics = [#tpu.dimension_semantics<parallel>, #tpu.dimension_semantics<arbitrary>], iteration_bounds = array<i64: 2, 1>, scalar_prefetch = 2 : i64, scratch_operands = 3 : i64, tpu.core_type = #tpu.core_type<tc>, window_params = [{transform_indices = @transform_0, window_bounds = array<i64: 1, 16, 32>}, {transform_indices = @transform_1, window_bounds = array<i64: 1, 16, 32>}, {transform_indices = @transform_2, window_bounds = array<i64: 1, 16, 32>}, {transform_indices = @transform_3, window_bounds = array<i64: 1, 16, 32>}]} {
    %0 = arith.index_cast %arg1 : i32 to index
    %1 = memref.load %arg2[%0] : memref<1xi32, #tpu.memory_space<smem>>
    %2 = arith.index_cast %arg1 : i32 to index
    %3 = memref.load %arg3[%2] : memref<1xi32, #tpu.memory_space<smem>>
    %c0_i32 = arith.constant 0 : i32
    %4 = arith.cmpi eq, %3, %c0_i32 : i32
    %5 = arith.extui %4 : i1 to i32
    %c0_i32_0 = arith.constant 0 : i32
    %6 = arith.cmpi ne, %5, %c0_i32_0 : i32
    scf.if %6 {
      %cst = arith.constant -1.000000e+30 : f32
      %13 = vector.broadcast %cst : f32 to vector<2x16x1xf32>
      %c0 = arith.constant 0 : index
      %c0_3 = arith.constant 0 : index
      %c0_4 = arith.constant 0 : index
      %14 = vector.load %arg8[%c0, %c0_3, %c0_4] : memref<2x16x1xf32, #tpu.memory_space<vmem>>, vector<2x16x1xf32>
      tpu.vector_store %arg8[%c0, %c0_3, %c0_4], %13 {strides = array<i32>} : memref<2x16x1xf32, #tpu.memory_space<vmem>>, vector<2x16x1xf32>,
      %cst_5 = arith.constant 0.000000e+00 : f32
      %15 = vector.broadcast %cst_5 : f32 to vector<2x16x1xf32>
      %c0_6 = arith.constant 0 : index
      %c0_7 = arith.constant 0 : index
      %c0_8 = arith.constant 0 : index
      %16 = vector.load %arg9[%c0_6, %c0_7, %c0_8] : memref<2x16x1xf32, #tpu.memory_space<vmem>>, vector<2x16x1xf32>
      tpu.vector_store %arg9[%c0_6, %c0_7, %c0_8], %15 {strides = array<i32>} : memref<2x16x1xf32, #tpu.memory_space<vmem>>, vector<2x16x1xf32>,
      %cst_9 = arith.constant 0.000000e+00 : f32
      %17 = vector.broadcast %cst_9 : f32 to vector<16x32xf32>
      %c0_10 = arith.constant 0 : index
      %c0_11 = arith.constant 0 : index
      %18 = vector.load %arg10[%c0_10, %c0_11] : memref<16x32xf32, #tpu.memory_space<vmem>>, vector<16x32xf32>
      tpu.vector_store %arg10[%c0_10, %c0_11], %17 {strides = array<i32>} : memref<16x32xf32, #tpu.memory_space<vmem>>, vector<16x32xf32>,
    } else {
    }
    %7 = arith.cmpi slt, %3, %1 : i32
    %8 = arith.extui %7 : i1 to i32
    %c0_i32_1 = arith.constant 0 : i32
    %9 = arith.cmpi ne, %8, %c0_i32_1 : i32
    scf.if %9 {
      %c0 = arith.constant 0 : index
      %c0_3 = arith.constant 0 : index
      %c0_4 = arith.constant 0 : index
      %13 = vector.load %arg4[%c0, %c0_3, %c0_4] : memref<1x16x32xbf16, #tpu.memory_space<vmem>>, vector<1x16x16xbf16>
      %14 = vector.shape_cast %13 : vector<1x16x16xbf16> to vector<16x16xbf16>
      %c0_5 = arith.constant 0 : index
      %c0_6 = arith.constant 0 : index
      %c0_7 = arith.constant 0 : index
      %15 = vector.load %arg5[%c0_5, %c0_6, %c0_7] : memref<1x16x32xbf16, #tpu.memory_space<vmem>>, vector<1x16x16xbf16>
      %16 = vector.shape_cast %15 : vector<1x16x16xbf16> to vector<16x16xbf16>
      %c0_8 = arith.constant 0 : index
      %c0_9 = arith.constant 0 : index
      %c0_10 = arith.constant 0 : index
      %17 = vector.load %arg6[%c0_8, %c0_9, %c0_10] : memref<1x16x32xbf16, #tpu.memory_space<vmem>>, vector<1x16x16xbf16>
      %18 = vector.shape_cast %17 : vector<1x16x16xbf16> to vector<16x16xbf16>
      %cst = arith.constant dense<0.000000e+00> : vector<16x16xf32>
      %19 = tpu.matmul %14, %16, %cst {dimension_numbers = #tpu.dot_dimension_numbers<[1], [1], [0], [0], [0, 0, 1, 0], [], []>} : vector<16x16xbf16>, vector<16x16xbf16>, vector<16x16xf32> -> vector<16x16xf32>
      %c0_11 = arith.constant 0 : index
      %c0_12 = arith.constant 0 : index
      %c0_13 = arith.constant 0 : index
      %20 = vector.load %arg8[%c0_11, %c0_12, %c0_13] : memref<2x16x1xf32, #tpu.memory_space<vmem>>, vector<1x16x1xf32>
      %21 = vector.shape_cast %20 : vector<1x16x1xf32> to vector<16x1xf32>
      %cst_14 = arith.constant dense<0xFF800000> : vector<16xf32>
      %22 = vector.multi_reduction <maximumf>, %19, %cst_14 [1] : vector<16x16xf32> to vector<16xf32>
      %23 = vector.shape_cast %22 : vector<16xf32> to vector<16x1xf32>
      %24 = arith.maximumf %21, %23 : vector<16x1xf32>
      %25 = arith.subf %21, %24 : vector<16x1xf32>
      %26 = math.exp %25 : vector<16x1xf32>
      %27 = vector.broadcast %24 : vector<16x1xf32> to vector<16x16xf32>
      %28 = arith.subf %19, %27 : vector<16x16xf32>
      %29 = math.exp %28 : vector<16x16xf32>
      %c0_15 = arith.constant 0 : index
      %c0_16 = arith.constant 0 : index
      %c0_17 = arith.constant 0 : index
      %30 = vector.load %arg9[%c0_15, %c0_16, %c0_17] : memref<2x16x1xf32, #tpu.memory_space<vmem>>, vector<1x16x1xf32>
      %31 = vector.shape_cast %30 : vector<1x16x1xf32> to vector<16x1xf32>
      %32 = arith.mulf %26, %31 : vector<16x1xf32>
      %cst_18 = arith.constant dense<0.000000e+00> : vector<16xf32>
      %33 = vector.multi_reduction <add>, %29, %cst_18 [1] : vector<16x16xf32> to vector<16xf32>
      %34 = vector.shape_cast %33 : vector<16xf32> to vector<16x1xf32>
      %35 = arith.addf %32, %34 : vector<16x1xf32>
      %c0_19 = arith.constant 0 : index
      %c0_20 = arith.constant 0 : index
      %c0_21 = arith.constant 0 : index
      %36 = vector.load %arg9[%c0_19, %c0_20, %c0_21] : memref<2x16x1xf32, #tpu.memory_space<vmem>>, vector<1x16x1xf32>
      %37 = vector.shape_cast %36 : vector<1x16x1xf32> to vector<16x1xf32>
      %38 = vector.shape_cast %35 : vector<16x1xf32> to vector<1x16x1xf32>
      tpu.vector_store %arg9[%c0_19, %c0_20, %c0_21], %38 {strides = array<i32>} : memref<2x16x1xf32, #tpu.memory_space<vmem>>, vector<1x16x1xf32>,
      %c0_22 = arith.constant 0 : index
      %c0_23 = arith.constant 0 : index
      %39 = vector.load %arg10[%c0_22, %c0_23] : memref<16x32xf32, #tpu.memory_space<vmem>>, vector<16x16xf32>
      %40 = vector.broadcast %26 : vector<16x1xf32> to vector<16x16xf32>
      %41 = arith.mulf %40, %39 : vector<16x16xf32>
      %42 = arith.truncf %29 : vector<16x16xf32> to vector<16x16xbf16>
      %cst_24 = arith.constant dense<0.000000e+00> : vector<16x16xf32>
      %43 = tpu.matmul %42, %18, %cst_24 {dimension_numbers = #tpu.dot_dimension_numbers<[1], [0], [0], [1], [0, 0, 1, 1], [], []>} : vector<16x16xbf16>, vector<16x16xbf16>, vector<16x16xf32> -> vector<16x16xf32>
      %44 = arith.addf %41, %43 : vector<16x16xf32>
      %c0_25 = arith.constant 0 : index
      %c0_26 = arith.constant 0 : index
      %45 = vector.load %arg10[%c0_25, %c0_26] : memref<16x32xf32, #tpu.memory_space<vmem>>, vector<16x16xf32>
      tpu.vector_store %arg10[%c0_25, %c0_26], %44 {strides = array<i32>} : memref<16x32xf32, #tpu.memory_space<vmem>>, vector<16x16xf32>,
      %c0_27 = arith.constant 0 : index
      %c0_28 = arith.constant 0 : index
      %c0_29 = arith.constant 0 : index
      %46 = vector.load %arg8[%c0_27, %c0_28, %c0_29] : memref<2x16x1xf32, #tpu.memory_space<vmem>>, vector<1x16x1xf32>
      %47 = vector.shape_cast %46 : vector<1x16x1xf32> to vector<16x1xf32>
      %48 = vector.shape_cast %24 : vector<16x1xf32> to vector<1x16x1xf32>
      tpu.vector_store %arg8[%c0_27, %c0_28, %c0_29], %48 {strides = array<i32>} : memref<2x16x1xf32, #tpu.memory_space<vmem>>, vector<1x16x1xf32>,
      %c0_30 = arith.constant 0 : index
      %c0_31 = arith.constant 0 : index
      %c16 = arith.constant 16 : index
      %49 = vector.load %arg4[%c0_30, %c0_31, %c16] : memref<1x16x32xbf16, #tpu.memory_space<vmem>>, vector<1x16x16xbf16>
      %50 = vector.shape_cast %49 : vector<1x16x16xbf16> to vector<16x16xbf16>
      %c0_32 = arith.constant 0 : index
      %c0_33 = arith.constant 0 : index
      %c16_34 = arith.constant 16 : index
      %51 = vector.load %arg5[%c0_32, %c0_33, %c16_34] : memref<1x16x32xbf16, #tpu.memory_space<vmem>>, vector<1x16x16xbf16>
      %52 = vector.shape_cast %51 : vector<1x16x16xbf16> to vector<16x16xbf16>
      %c0_35 = arith.constant 0 : index
      %c0_36 = arith.constant 0 : index
      %c16_37 = arith.constant 16 : index
      %53 = vector.load %arg6[%c0_35, %c0_36, %c16_37] : memref<1x16x32xbf16, #tpu.memory_space<vmem>>, vector<1x16x16xbf16>
      %54 = vector.shape_cast %53 : vector<1x16x16xbf16> to vector<16x16xbf16>
      %cst_38 = arith.constant dense<0.000000e+00> : vector<16x16xf32>
      %55 = tpu.matmul %50, %52, %cst_38 {dimension_numbers = #tpu.dot_dimension_numbers<[1], [1], [0], [0], [0, 0, 1, 0], [], []>} : vector<16x16xbf16>, vector<16x16xbf16>, vector<16x16xf32> -> vector<16x16xf32>
      %c1 = arith.constant 1 : index
      %c0_39 = arith.constant 0 : index
      %c0_40 = arith.constant 0 : index
      %56 = vector.load %arg8[%c1, %c0_39, %c0_40] : memref<2x16x1xf32, #tpu.memory_space<vmem>>, vector<1x16x1xf32>
      %57 = vector.shape_cast %56 : vector<1x16x1xf32> to vector<16x1xf32>
      %cst_41 = arith.constant dense<0xFF800000> : vector<16xf32>
      %58 = vector.multi_reduction <maximumf>, %55, %cst_41 [1] : vector<16x16xf32> to vector<16xf32>
      %59 = vector.shape_cast %58 : vector<16xf32> to vector<16x1xf32>
      %60 = arith.maximumf %57, %59 : vector<16x1xf32>
      %61 = arith.subf %57, %60 : vector<16x1xf32>
      %62 = math.exp %61 : vector<16x1xf32>
      %63 = vector.broadcast %60 : vector<16x1xf32> to vector<16x16xf32>
      %64 = arith.subf %55, %63 : vector<16x16xf32>
      %65 = math.exp %64 : vector<16x16xf32>
      %c1_42 = arith.constant 1 : index
      %c0_43 = arith.constant 0 : index
      %c0_44 = arith.constant 0 : index
      %66 = vector.load %arg9[%c1_42, %c0_43, %c0_44] : memref<2x16x1xf32, #tpu.memory_space<vmem>>, vector<1x16x1xf32>
      %67 = vector.shape_cast %66 : vector<1x16x1xf32> to vector<16x1xf32>
      %68 = arith.mulf %62, %67 : vector<16x1xf32>
      %cst_45 = arith.constant dense<0.000000e+00> : vector<16xf32>
      %69 = vector.multi_reduction <add>, %65, %cst_45 [1] : vector<16x16xf32> to vector<16xf32>
      %70 = vector.shape_cast %69 : vector<16xf32> to vector<16x1xf32>
      %71 = arith.addf %68, %70 : vector<16x1xf32>
      %c1_46 = arith.constant 1 : index
      %c0_47 = arith.constant 0 : index
      %c0_48 = arith.constant 0 : index
      %72 = vector.load %arg9[%c1_46, %c0_47, %c0_48] : memref<2x16x1xf32, #tpu.memory_space<vmem>>, vector<1x16x1xf32>
      %73 = vector.shape_cast %72 : vector<1x16x1xf32> to vector<16x1xf32>
      %74 = vector.shape_cast %71 : vector<16x1xf32> to vector<1x16x1xf32>
      tpu.vector_store %arg9[%c1_46, %c0_47, %c0_48], %74 {strides = array<i32>} : memref<2x16x1xf32, #tpu.memory_space<vmem>>, vector<1x16x1xf32>,
      %c0_49 = arith.constant 0 : index
      %c16_50 = arith.constant 16 : index
      %75 = vector.load %arg10[%c0_49, %c16_50] : memref<16x32xf32, #tpu.memory_space<vmem>>, vector<16x16xf32>
      %76 = vector.broadcast %62 : vector<16x1xf32> to vector<16x16xf32>
      %77 = arith.mulf %76, %75 : vector<16x16xf32>
      %78 = arith.truncf %65 : vector<16x16xf32> to vector<16x16xbf16>
      %cst_51 = arith.constant dense<0.000000e+00> : vector<16x16xf32>
      %79 = tpu.matmul %78, %54, %cst_51 {dimension_numbers = #tpu.dot_dimension_numbers<[1], [0], [0], [1], [0, 0, 1, 1], [], []>} : vector<16x16xbf16>, vector<16x16xbf16>, vector<16x16xf32> -> vector<16x16xf32>
      %80 = arith.addf %77, %79 : vector<16x16xf32>
      %c0_52 = arith.constant 0 : index
      %c16_53 = arith.constant 16 : index
      %81 = vector.load %arg10[%c0_52, %c16_53] : memref<16x32xf32, #tpu.memory_space<vmem>>, vector<16x16xf32>
      tpu.vector_store %arg10[%c0_52, %c16_53], %80 {strides = array<i32>} : memref<16x32xf32, #tpu.memory_space<vmem>>, vector<16x16xf32>,
      %c1_54 = arith.constant 1 : index
      %c0_55 = arith.constant 0 : index
      %c0_56 = arith.constant 0 : index
      %82 = vector.load %arg8[%c1_54, %c0_55, %c0_56] : memref<2x16x1xf32, #tpu.memory_space<vmem>>, vector<1x16x1xf32>
      %83 = vector.shape_cast %82 : vector<1x16x1xf32> to vector<16x1xf32>
      %84 = vector.shape_cast %60 : vector<16x1xf32> to vector<1x16x1xf32>
      tpu.vector_store %arg8[%c1_54, %c0_55, %c0_56], %84 {strides = array<i32>} : memref<2x16x1xf32, #tpu.memory_space<vmem>>, vector<1x16x1xf32>,
    } else {
    }
    %10 = arith.cmpi eq, %3, %1 : i32
    %11 = arith.extui %10 : i1 to i32
    %c0_i32_2 = arith.constant 0 : i32
    %12 = arith.cmpi ne, %11, %c0_i32_2 : i32
    scf.if %12 {
      %13 = tpu.iota {dimensions = array<i32: 0>} : vector<16x16xi32>
      %14 = tpu.iota {dimensions = array<i32: 1>} : vector<16x16xi32>
      %15 = arith.cmpi sgt, %14, %13 : vector<16x16xi32>
      %cst = arith.constant -1.000000e+30 : f32
      %cst_3 = arith.constant 0.000000e+00 : f32
      %16 = vector.broadcast %cst : f32 to vector<16x16xf32>
      %17 = vector.broadcast %cst_3 : f32 to vector<16x16xf32>
      %18 = arith.select %15, %16, %17 : vector<16x16xi1>, vector<16x16xf32>
      %c0 = arith.constant 0 : index
      %c0_4 = arith.constant 0 : index
      %c0_5 = arith.constant 0 : index
      %19 = vector.load %arg4[%c0, %c0_4, %c0_5] : memref<1x16x32xbf16, #tpu.memory_space<vmem>>, vector<1x16x16xbf16>
      %20 = vector.shape_cast %19 : vector<1x16x16xbf16> to vector<16x16xbf16>
      %c0_6 = arith.constant 0 : index
      %c0_7 = arith.constant 0 : index
      %c0_8 = arith.constant 0 : index
      %21 = vector.load %arg5[%c0_6, %c0_7, %c0_8] : memref<1x16x32xbf16, #tpu.memory_space<vmem>>, vector<1x16x16xbf16>
      %22 = vector.shape_cast %21 : vector<1x16x16xbf16> to vector<16x16xbf16>
      %c0_9 = arith.constant 0 : index
      %c0_10 = arith.constant 0 : index
      %c0_11 = arith.constant 0 : index
      %23 = vector.load %arg6[%c0_9, %c0_10, %c0_11] : memref<1x16x32xbf16, #tpu.memory_space<vmem>>, vector<1x16x16xbf16>
      %24 = vector.shape_cast %23 : vector<1x16x16xbf16> to vector<16x16xbf16>
      %cst_12 = arith.constant dense<0.000000e+00> : vector<16x16xf32>
      %25 = tpu.matmul %20, %22, %cst_12 {dimension_numbers = #tpu.dot_dimension_numbers<[1], [1], [0], [0], [0, 0, 1, 0], [], []>} : vector<16x16xbf16>, vector<16x16xbf16>, vector<16x16xf32> -> vector<16x16xf32>
      %26 = arith.addf %25, %18 : vector<16x16xf32>
      %c0_13 = arith.constant 0 : index
      %c0_14 = arith.constant 0 : index
      %c0_15 = arith.constant 0 : index
      %27 = vector.load %arg8[%c0_13, %c0_14, %c0_15] : memref<2x16x1xf32, #tpu.memory_space<vmem>>, vector<1x16x1xf32>
      %28 = vector.shape_cast %27 : vector<1x16x1xf32> to vector<16x1xf32>
      %cst_16 = arith.constant dense<0xFF800000> : vector<16xf32>
      %29 = vector.multi_reduction <maximumf>, %26, %cst_16 [1] : vector<16x16xf32> to vector<16xf32>
      %30 = vector.shape_cast %29 : vector<16xf32> to vector<16x1xf32>
      %31 = arith.maximumf %28, %30 : vector<16x1xf32>
      %32 = arith.subf %28, %31 : vector<16x1xf32>
      %33 = math.exp %32 : vector<16x1xf32>
      %34 = vector.broadcast %31 : vector<16x1xf32> to vector<16x16xf32>
      %35 = arith.subf %26, %34 : vector<16x16xf32>
      %36 = math.exp %35 : vector<16x16xf32>
      %c0_17 = arith.constant 0 : index
      %c0_18 = arith.constant 0 : index
      %c0_19 = arith.constant 0 : index
      %37 = vector.load %arg9[%c0_17, %c0_18, %c0_19] : memref<2x16x1xf32, #tpu.memory_space<vmem>>, vector<1x16x1xf32>
      %38 = vector.shape_cast %37 : vector<1x16x1xf32> to vector<16x1xf32>
      %39 = arith.mulf %33, %38 : vector<16x1xf32>
      %cst_20 = arith.constant dense<0.000000e+00> : vector<16xf32>
      %40 = vector.multi_reduction <add>, %36, %cst_20 [1] : vector<16x16xf32> to vector<16xf32>
      %41 = vector.shape_cast %40 : vector<16xf32> to vector<16x1xf32>
      %42 = arith.addf %39, %41 : vector<16x1xf32>
      %c0_21 = arith.constant 0 : index
      %c0_22 = arith.constant 0 : index
      %c0_23 = arith.constant 0 : index
      %43 = vector.load %arg9[%c0_21, %c0_22, %c0_23] : memref<2x16x1xf32, #tpu.memory_space<vmem>>, vector<1x16x1xf32>
      %44 = vector.shape_cast %43 : vector<1x16x1xf32> to vector<16x1xf32>
      %45 = vector.shape_cast %42 : vector<16x1xf32> to vector<1x16x1xf32>
      tpu.vector_store %arg9[%c0_21, %c0_22, %c0_23], %45 {strides = array<i32>} : memref<2x16x1xf32, #tpu.memory_space<vmem>>, vector<1x16x1xf32>,
      %c0_24 = arith.constant 0 : index
      %c0_25 = arith.constant 0 : index
      %46 = vector.load %arg10[%c0_24, %c0_25] : memref<16x32xf32, #tpu.memory_space<vmem>>, vector<16x16xf32>
      %47 = vector.broadcast %33 : vector<16x1xf32> to vector<16x16xf32>
      %48 = arith.mulf %47, %46 : vector<16x16xf32>
      %49 = arith.truncf %36 : vector<16x16xf32> to vector<16x16xbf16>
      %cst_26 = arith.constant dense<0.000000e+00> : vector<16x16xf32>
      %50 = tpu.matmul %49, %24, %cst_26 {dimension_numbers = #tpu.dot_dimension_numbers<[1], [0], [0], [1], [0, 0, 1, 1], [], []>} : vector<16x16xbf16>, vector<16x16xbf16>, vector<16x16xf32> -> vector<16x16xf32>
      %51 = arith.addf %48, %50 : vector<16x16xf32>
      %c0_27 = arith.constant 0 : index
      %c0_28 = arith.constant 0 : index
      %52 = vector.load %arg10[%c0_27, %c0_28] : memref<16x32xf32, #tpu.memory_space<vmem>>, vector<16x16xf32>
      tpu.vector_store %arg10[%c0_27, %c0_28], %51 {strides = array<i32>} : memref<16x32xf32, #tpu.memory_space<vmem>>, vector<16x16xf32>,
      %c0_29 = arith.constant 0 : index
      %c0_30 = arith.constant 0 : index
      %c0_31 = arith.constant 0 : index
      %53 = vector.load %arg8[%c0_29, %c0_30, %c0_31] : memref<2x16x1xf32, #tpu.memory_space<vmem>>, vector<1x16x1xf32>
      %54 = vector.shape_cast %53 : vector<1x16x1xf32> to vector<16x1xf32>
      %55 = vector.shape_cast %31 : vector<16x1xf32> to vector<1x16x1xf32>
      tpu.vector_store %arg8[%c0_29, %c0_30, %c0_31], %55 {strides = array<i32>} : memref<2x16x1xf32, #tpu.memory_space<vmem>>, vector<1x16x1xf32>,
      %c0_32 = arith.constant 0 : index
      %c0_33 = arith.constant 0 : index
      %c16 = arith.constant 16 : index
      %56 = vector.load %arg4[%c0_32, %c0_33, %c16] : memref<1x16x32xbf16, #tpu.memory_space<vmem>>, vector<1x16x16xbf16>
      %57 = vector.shape_cast %56 : vector<1x16x16xbf16> to vector<16x16xbf16>
      %c0_34 = arith.constant 0 : index
      %c0_35 = arith.constant 0 : index
      %c16_36 = arith.constant 16 : index
      %58 = vector.load %arg5[%c0_34, %c0_35, %c16_36] : memref<1x16x32xbf16, #tpu.memory_space<vmem>>, vector<1x16x16xbf16>
      %59 = vector.shape_cast %58 : vector<1x16x16xbf16> to vector<16x16xbf16>
      %c0_37 = arith.constant 0 : index
      %c0_38 = arith.constant 0 : index
      %c16_39 = arith.constant 16 : index
      %60 = vector.load %arg6[%c0_37, %c0_38, %c16_39] : memref<1x16x32xbf16, #tpu.memory_space<vmem>>, vector<1x16x16xbf16>
      %61 = vector.shape_cast %60 : vector<1x16x16xbf16> to vector<16x16xbf16>
      %cst_40 = arith.constant dense<0.000000e+00> : vector<16x16xf32>
      %62 = tpu.matmul %57, %59, %cst_40 {dimension_numbers = #tpu.dot_dimension_numbers<[1], [1], [0], [0], [0, 0, 1, 0], [], []>} : vector<16x16xbf16>, vector<16x16xbf16>, vector<16x16xf32> -> vector<16x16xf32>
      %63 = arith.addf %62, %18 : vector<16x16xf32>
      %c1 = arith.constant 1 : index
      %c0_41 = arith.constant 0 : index
      %c0_42 = arith.constant 0 : index
      %64 = vector.load %arg8[%c1, %c0_41, %c0_42] : memref<2x16x1xf32, #tpu.memory_space<vmem>>, vector<1x16x1xf32>
      %65 = vector.shape_cast %64 : vector<1x16x1xf32> to vector<16x1xf32>
      %cst_43 = arith.constant dense<0xFF800000> : vector<16xf32>
      %66 = vector.multi_reduction <maximumf>, %63, %cst_43 [1] : vector<16x16xf32> to vector<16xf32>
      %67 = vector.shape_cast %66 : vector<16xf32> to vector<16x1xf32>
      %68 = arith.maximumf %65, %67 : vector<16x1xf32>
      %69 = arith.subf %65, %68 : vector<16x1xf32>
      %70 = math.exp %69 : vector<16x1xf32>
      %71 = vector.broadcast %68 : vector<16x1xf32> to vector<16x16xf32>
      %72 = arith.subf %63, %71 : vector<16x16xf32>
      %73 = math.exp %72 : vector<16x16xf32>
      %c1_44 = arith.constant 1 : index
      %c0_45 = arith.constant 0 : index
      %c0_46 = arith.constant 0 : index
      %74 = vector.load %arg9[%c1_44, %c0_45, %c0_46] : memref<2x16x1xf32, #tpu.memory_space<vmem>>, vector<1x16x1xf32>
      %75 = vector.shape_cast %74 : vector<1x16x1xf32> to vector<16x1xf32>
      %76 = arith.mulf %70, %75 : vector<16x1xf32>
      %cst_47 = arith.constant dense<0.000000e+00> : vector<16xf32>
      %77 = vector.multi_reduction <add>, %73, %cst_47 [1] : vector<16x16xf32> to vector<16xf32>
      %78 = vector.shape_cast %77 : vector<16xf32> to vector<16x1xf32>
      %79 = arith.addf %76, %78 : vector<16x1xf32>
      %c1_48 = arith.constant 1 : index
      %c0_49 = arith.constant 0 : index
      %c0_50 = arith.constant 0 : index
      %80 = vector.load %arg9[%c1_48, %c0_49, %c0_50] : memref<2x16x1xf32, #tpu.memory_space<vmem>>, vector<1x16x1xf32>
      %81 = vector.shape_cast %80 : vector<1x16x1xf32> to vector<16x1xf32>
      %82 = vector.shape_cast %79 : vector<16x1xf32> to vector<1x16x1xf32>
      tpu.vector_store %arg9[%c1_48, %c0_49, %c0_50], %82 {strides = array<i32>} : memref<2x16x1xf32, #tpu.memory_space<vmem>>, vector<1x16x1xf32>,
      %c0_51 = arith.constant 0 : index
      %c16_52 = arith.constant 16 : index
      %83 = vector.load %arg10[%c0_51, %c16_52] : memref<16x32xf32, #tpu.memory_space<vmem>>, vector<16x16xf32>
      %84 = vector.broadcast %70 : vector<16x1xf32> to vector<16x16xf32>
      %85 = arith.mulf %84, %83 : vector<16x16xf32>
      %86 = arith.truncf %73 : vector<16x16xf32> to vector<16x16xbf16>
      %cst_53 = arith.constant dense<0.000000e+00> : vector<16x16xf32>
      %87 = tpu.matmul %86, %61, %cst_53 {dimension_numbers = #tpu.dot_dimension_numbers<[1], [0], [0], [1], [0, 0, 1, 1], [], []>} : vector<16x16xbf16>, vector<16x16xbf16>, vector<16x16xf32> -> vector<16x16xf32>
      %88 = arith.addf %85, %87 : vector<16x16xf32>
      %c0_54 = arith.constant 0 : index
      %c16_55 = arith.constant 16 : index
      %89 = vector.load %arg10[%c0_54, %c16_55] : memref<16x32xf32, #tpu.memory_space<vmem>>, vector<16x16xf32>
      tpu.vector_store %arg10[%c0_54, %c16_55], %88 {strides = array<i32>} : memref<16x32xf32, #tpu.memory_space<vmem>>, vector<16x16xf32>,
      %c1_56 = arith.constant 1 : index
      %c0_57 = arith.constant 0 : index
      %c0_58 = arith.constant 0 : index
      %90 = vector.load %arg8[%c1_56, %c0_57, %c0_58] : memref<2x16x1xf32, #tpu.memory_space<vmem>>, vector<1x16x1xf32>
      %91 = vector.shape_cast %90 : vector<1x16x1xf32> to vector<16x1xf32>
      %92 = vector.shape_cast %68 : vector<16x1xf32> to vector<1x16x1xf32>
      tpu.vector_store %arg8[%c1_56, %c0_57, %c0_58], %92 {strides = array<i32>} : memref<2x16x1xf32, #tpu.memory_space<vmem>>, vector<1x16x1xf32>,
      %c0_59 = arith.constant 0 : index
      %c0_60 = arith.constant 0 : index
      %c0_61 = arith.constant 0 : index
      %93 = vector.load %arg9[%c0_59, %c0_60, %c0_61] : memref<2x16x1xf32, #tpu.memory_space<vmem>>, vector<1x16x1xf32>
      %94 = vector.shape_cast %93 : vector<1x16x1xf32> to vector<16x1xf32>
      %95 = tpu.reciprocal %94 {approx = true} : vector<16x1xf32> -> vector<16x1xf32>
      %c0_62 = arith.constant 0 : index
      %c0_63 = arith.constant 0 : index
      %96 = vector.load %arg10[%c0_62, %c0_63] : memref<16x32xf32, #tpu.memory_space<vmem>>, vector<16x16xf32>
      %97 = vector.broadcast %95 : vector<16x1xf32> to vector<16x16xf32>
      %98 = arith.mulf %96, %97 : vector<16x16xf32>
      %c0_64 = arith.constant 0 : index
      %c0_65 = arith.constant 0 : index
      %99 = vector.load %arg10[%c0_64, %c0_65] : memref<16x32xf32, #tpu.memory_space<vmem>>, vector<16x16xf32>
      tpu.vector_store %arg10[%c0_64, %c0_65], %98 {strides = array<i32>} : memref<16x32xf32, #tpu.memory_space<vmem>>, vector<16x16xf32>,
      %c1_66 = arith.constant 1 : index
      %c0_67 = arith.constant 0 : index
      %c0_68 = arith.constant 0 : index
      %100 = vector.load %arg9[%c1_66, %c0_67, %c0_68] : memref<2x16x1xf32, #tpu.memory_space<vmem>>, vector<1x16x1xf32>
      %101 = vector.shape_cast %100 : vector<1x16x1xf32> to vector<16x1xf32>
      %102 = tpu.reciprocal %101 {approx = true} : vector<16x1xf32> -> vector<16x1xf32>
      %c0_69 = arith.constant 0 : index
      %c16_70 = arith.constant 16 : index
      %103 = vector.load %arg10[%c0_69, %c16_70] : memref<16x32xf32, #tpu.memory_space<vmem>>, vector<16x16xf32>
      %104 = vector.broadcast %102 : vector<16x1xf32> to vector<16x16xf32>
      %105 = arith.mulf %103, %104 : vector<16x16xf32>
      %c0_71 = arith.constant 0 : index
      %c16_72 = arith.constant 16 : index
      %106 = vector.load %arg10[%c0_71, %c16_72] : memref<16x32xf32, #tpu.memory_space<vmem>>, vector<16x16xf32>
      tpu.vector_store %arg10[%c0_71, %c16_72], %105 {strides = array<i32>} : memref<16x32xf32, #tpu.memory_space<vmem>>, vector<16x16xf32>,
      %c0_73 = arith.constant 0 : index
      %c0_74 = arith.constant 0 : index
      %107 = vector.load %arg10[%c0_73, %c0_74] : memref<16x32xf32, #tpu.memory_space<vmem>>, vector<16x32xf32>
      %108 = arith.truncf %107 : vector<16x32xf32> to vector<16x32xbf16>
      %c0_75 = arith.constant 0 : index
      %c0_76 = arith.constant 0 : index
      %c0_77 = arith.constant 0 : index
      %109 = vector.load %arg7[%c0_75, %c0_76, %c0_77] : memref<1x16x32xbf16, #tpu.memory_space<vmem>>, vector<1x16x32xbf16>
      %110 = vector.shape_cast %109 : vector<1x16x32xbf16> to vector<16x32xbf16>
      %111 = vector.shape_cast %108 : vector<16x32xbf16> to vector<1x16x32xbf16>
      tpu.vector_store %arg7[%c0_75, %c0_76, %c0_77], %111 {strides = array<i32>} : memref<1x16x32xbf16, #tpu.memory_space<vmem>>, vector<1x16x32xbf16>,
    } else {
    }
    return
  }
  func.func @transform_0(%arg0: i32, %arg1: i32, %arg2: memref<1xi32, #tpu.memory_space<smem>>, %arg3: memref<1xi32, #tpu.memory_space<smem>>) -> (i32, i32, i32) {
    %0 = arith.index_cast %arg1 : i32 to index
    %1 = memref.load %arg2[%0] : memref<1xi32, #tpu.memory_space<smem>>
    %c0_i32 = arith.constant 0 : i32
    %c0_i32_0 = arith.constant 0 : i32
    return %arg0, %1, %c0_i32 : i32, i32, i32
  }
  func.func @transform_1(%arg0: i32, %arg1: i32, %arg2: memref<1xi32, #tpu.memory_space<smem>>, %arg3: memref<1xi32, #tpu.memory_space<smem>>) -> (i32, i32, i32) {
    %0 = arith.index_cast %arg1 : i32 to index
    %1 = memref.load %arg3[%0] : memref<1xi32, #tpu.memory_space<smem>>
    %c0_i32 = arith.constant 0 : i32
    %c0_i32_0 = arith.constant 0 : i32
    return %arg0, %1, %c0_i32 : i32, i32, i32
  }
  func.func @transform_2(%arg0: i32, %arg1: i32, %arg2: memref<1xi32, #tpu.memory_space<smem>>, %arg3: memref<1xi32, #tpu.memory_space<smem>>) -> (i32, i32, i32) {
    %0 = arith.index_cast %arg1 : i32 to index
    %1 = memref.load %arg3[%0] : memref<1xi32, #tpu.memory_space<smem>>
    %c0_i32 = arith.constant 0 : i32
    %c0_i32_0 = arith.constant 0 : i32
    return %arg0, %1, %c0_i32 : i32, i32, i32
  }
  func.func @transform_3(%arg0: i32, %arg1: i32, %arg2: memref<1xi32, #tpu.memory_space<smem>>, %arg3: memref<1xi32, #tpu.memory_space<smem>>) -> (i32, i32, i32) {
    %0 = arith.index_cast %arg1 : i32 to index
    %1 = memref.load %arg2[%0] : memref<1xi32, #tpu.memory_space<smem>>
    %c0_i32 = arith.constant 0 : i32
    %c0_i32_0 = arith.constant 0 : i32
    return %arg0, %1, %c0_i32 : i32, i32, i32
  }
}

</mosaic_0001>

<llo_original>
// kernel: tpu_custom_call.1
$region0: #{tpu_custom_call.1}
  #allocation0 [shape = 'u32[]', space=smem, size = 0x4, offset = 0x4, fixed_abs, tag = 'smem constant byte address 0x4 - core index']
  #allocation1 [shape = 'u32[144,128]{1,0:T(1,128)}', space=vmem, size = 0x12000, scoped, tag = 'internal scratch']
  #allocation2 [shape = 'f32[2,16,1]{2,1,0:T(8,128)}', space=vmem, size = 0x4000, scoped, tag = 'scratch operand']
  #allocation3 [shape = 'f32[2,16,1]{2,1,0:T(8,128)}', space=vmem, size = 0x4000, scoped, tag = 'scratch operand']
  #allocation4 [shape = 'f32[16,32]{1,0:T(8,128)}', space=vmem, size = 0x2000, scoped, tag = 'scratch operand']
  #allocation5 [shape = 's32[1]{0}', space=sflag, size = 0x4, scoped, tag = 'scoped memory for tpu_custom_call.1']
  #allocation6 [shape = 's32[1]{0:T(128)S(6)}', space=smem, size = 0x200, scoped, tag = 'prefetched SMEM operand 0']
  #allocation7 [shape = 's32[1]{0:T(128)S(6)}', space=smem, size = 0x200, scoped, tag = 'prefetched SMEM operand 1']
  %s0 = inlined_call_operand.<no memory space> [shape: s32[1], index: 0, kind: input, shape index: {}]
  %s1 = inlined_call_operand.<no memory space> [shape: s32[1], index: 1, kind: input, shape index: {}]
  %s2 = inlined_call_operand.hbm [shape: bf16[2,16,32], index: 2, kind: input, shape index: {}]
  %s3 = inlined_call_operand.hbm [shape: bf16[2,16,32], index: 3, kind: input, shape index: {}]
  %s4 = inlined_call_operand.hbm [shape: bf16[2,16,32], index: 4, kind: input, shape index: {}]
  %s5 = inlined_call_operand.hbm [shape: bf16[2,16,32], index: 5, kind: output, shape index: {}]
  %s6 = sld [smem:[#allocation0]]
  $region69: #{tpu_custom_call.1} parent=0
    _
  %s8 = ssub.s32 1, %s6
  %s9 = scalar_select 0, %s8, %s6
  %10 = sst [smem:[#allocation6]] %s0
  %11 = sst [smem:[#allocation7]] %s1
  $region1: #{tpu_custom_call.1} parent=0
    #allocation8 [shape = 'u8[8192]{0}', space=vmem, size = 0x2000, scoped, tag = 'input window, operand 2']
    #allocation9 [shape = 's32[2]{0}', space=sflag, size = 0x8, scoped, tag = 'scoped memory for tpu_custom_call.1']
    #allocation10 [shape = 's32[2]{0}', space=sflag, size = 0x8, scoped, tag = 'scoped memory for tpu_custom_call.1']
    #allocation11 [shape = 'u8[8192]{0}', space=vmem, size = 0x2000, scoped, tag = 'input window, operand 3']
    #allocation12 [shape = 's32[2]{0}', space=sflag, size = 0x8, scoped, tag = 'scoped memory for tpu_custom_call.1']
    #allocation13 [shape = 'u8[8192]{0}', space=vmem, size = 0x2000, scoped, tag = 'input window, operand 4']
    #allocation14 [shape = 'u8[8192]{0}', space=vmem, size = 0x2000, scoped, tag = 'output window, operand 0']
    %12 = vsyncpa [#allocation9], 0
    %s13 = scalar_lea.sflag [#allocation9], 1
    %14 = vsyncpa %s13, 0
    %15 = vsyncpa [#allocation12], 0
    %s16 = scalar_lea.sflag [#allocation12], 1
    %17 = vsyncpa %s16, 0
    %18 = vsyncpa [#allocation10], 0
    %s19 = scalar_lea.sflag [#allocation10], 1
    %20 = vsyncpa %s19, 0
    loop: start=0, step=1, limit=4
    $region2: #{tpu_custom_call.1} parent=1 // loop_pre_header
      _
    $region3: #{tpu_custom_call.1} parent=1 // loop_header
      %s22 = sphi 0, %s26
      %p23 = scmp.ge.s32.totalorder %s22, 4
      %s29 = sphi 0, %s41
      %s30 = sphi 0, %s37
      %s31 = sphi 0, %s29
      %s32 = sphi 0, %s30
      %s33 = sphi 0, %s31
      %s34 = sphi 0, %s32
      %s48 = sphi 0, %s50
      %s51 = sphi 0, %s48
      %s52 = sphi 0, %s51
      %s68 = sphi 0, %s52
      %s78 = sphi 0, %s80
      %s81 = sphi 0, %s78
      %s82 = sphi 0, %s81
      %s98 = sphi 0, %s82
      %s108 = sphi 0, %s110
      %s111 = sphi 0, %s108
      %s112 = sphi 0, %s111
      %s128 = sphi 0, %s112
      %s138 = sphi 0, %s140
      %s141 = sphi 0, %s138
      %s142 = sphi 0, %s141
      %s158 = sphi 0, %s142
    $region4: #{tpu_custom_call.1} parent=1 // loop_header_branch
      %25 = sbr.rel (%p23) target = $region8
    $region5: #{tpu_custom_call.1} parent=1 // loop_body
      %s27 = ssub.s32 %s22, 1
      %s28 = ssub.s32 %s22, 2
      %s35 = sadd.s32 1, %s30
      %p36 = scmp.ge.s32.totalorder %s35, 1
      %s37 = scalar_select %p36, 0, %s35
      %s38 = sadd.s32 1, %s29
      %s39 = scalar_select %p36, %s38, %s29
      %p40 = scmp.ge.s32.totalorder %s39, 2
      %s41 = scalar_select %p40, 0, %s39
      %s42 = sld [smem:[#allocation6 + %s30]]
      %s43 = sld [smem:[#allocation6 + %s37]]
      %s44 = ssub.s32 %s29, %s41
      %s45 = ssub.s32 %s42, %s43
      %s46 = sor.u32 %s44, %s45
      %p47 = scmp.eq.s32.totalorder %s46, 0
      %s49 = sadd.s32 %s48, 1
      %s50 = scalar_select %p47, %s48, %s49
      %p53 = pneg %p47
      %p54 = scmp.eq.s32.totalorder %s22, 1
      %p55 = por %p53, %p54
      %p56 = scmp.ne.s32.totalorder %s48, %s51
      %p57 = scmp.eq.s32.totalorder %s22, 0
      %p58 = por %p56, %p57
      %p59 = scmp.ne.s32.totalorder %s48, %s51
      %p60 = scmp.eq.s32.totalorder %s27, 1
      %p61 = por %p59, %p60
      %p62 = scmp.ne.s32.totalorder %s51, %s52
      %p63 = scmp.eq.s32.totalorder %s27, 0
      %p64 = por %p62, %p63
      %p65 = scmp.ne.s32.totalorder %s51, %s52
      %p66 = scmp.eq.s32.totalorder %s28, 1
      %p67 = por %p65, %p66
      %p69 = scmp.ne.s32.totalorder %s52, %s68
      %p70 = scmp.eq.s32.totalorder %s28, 0
      %p71 = por %p69, %p70
      %s72 = sld [smem:[#allocation7 + %s30]]
      %s73 = sld [smem:[#allocation7 + %s37]]
      %s74 = ssub.s32 %s29, %s41
      %s75 = ssub.s32 %s72, %s73
      %s76 = sor.u32 %s74, %s75
      %p77 = scmp.eq.s32.totalorder %s76, 0
      %s79 = sadd.s32 %s78, 1
      %s80 = scalar_select %p77, %s78, %s79
      %p83 = pneg %p77
      %p84 = scmp.eq.s32.totalorder %s22, 1
      %p85 = por %p83, %p84
      %p86 = scmp.ne.s32.totalorder %s78, %s81
      %p87 = scmp.eq.s32.totalorder %s22, 0
      %p88 = por %p86, %p87
      %p89 = scmp.ne.s32.totalorder %s78, %s81
      %p90 = scmp.eq.s32.totalorder %s27, 1
      %p91 = por %p89, %p90
      %p92 = scmp.ne.s32.totalorder %s81, %s82
      %p93 = scmp.eq.s32.totalorder %s27, 0
      %p94 = por %p92, %p93
      %p95 = scmp.ne.s32.totalorder %s81, %s82
      %p96 = scmp.eq.s32.totalorder %s28, 1
      %p97 = por %p95, %p96
      %p99 = scmp.ne.s32.totalorder %s82, %s98
      %p100 = scmp.eq.s32.totalorder %s28, 0
      %p101 = por %p99, %p100
      %s102 = sld [smem:[#allocation7 + %s30]]
      %s103 = sld [smem:[#allocation7 + %s37]]
      %s104 = ssub.s32 %s29, %s41
      %s105 = ssub.s32 %s102, %s103
      %s106 = sor.u32 %s104, %s105
      %p107 = scmp.eq.s32.totalorder %s106, 0
      %s109 = sadd.s32 %s108, 1
      %s110 = scalar_select %p107, %s108, %s109
      %p113 = pneg %p107
      %p114 = scmp.eq.s32.totalorder %s22, 1
      %p115 = por %p113, %p114
      %p116 = scmp.ne.s32.totalorder %s108, %s111
      %p117 = scmp.eq.s32.totalorder %s22, 0
      %p118 = por %p116, %p117
      %p119 = scmp.ne.s32.totalorder %s108, %s111
      %p120 = scmp.eq.s32.totalorder %s27, 1
      %p121 = por %p119, %p120
      %p122 = scmp.ne.s32.totalorder %s111, %s112
      %p123 = scmp.eq.s32.totalorder %s27, 0
      %p124 = por %p122, %p123
      %p125 = scmp.ne.s32.totalorder %s111, %s112
      %p126 = scmp.eq.s32.totalorder %s28, 1
      %p127 = por %p125, %p126
      %p129 = scmp.ne.s32.totalorder %s112, %s128
      %p130 = scmp.eq.s32.totalorder %s28, 0
      %p131 = por %p129, %p130
      %s132 = sld [smem:[#allocation6 + %s30]]
      %s133 = sld [smem:[#allocation6 + %s37]]
      %s134 = ssub.s32 %s29, %s41
      %s135 = ssub.s32 %s132, %s133
      %s136 = sor.u32 %s134, %s135
      %p137 = scmp.eq.s32.totalorder %s136, 0
      %s139 = sadd.s32 %s138, 1
      %s140 = scalar_select %p137, %s138, %s139
      %p143 = pneg %p137
      %p144 = scmp.eq.s32.totalorder %s22, 1
      %p145 = por %p143, %p144
      %p146 = scmp.ne.s32.totalorder %s138, %s141
      %p147 = scmp.eq.s32.totalorder %s22, 0
      %p148 = por %p146, %p147
      %p149 = scmp.ne.s32.totalorder %s138, %s141
      %p150 = scmp.eq.s32.totalorder %s27, 1
      %p151 = por %p149, %p150
      %p152 = scmp.ne.s32.totalorder %s141, %s142
      %p153 = scmp.eq.s32.totalorder %s27, 0
      %p154 = por %p152, %p153
      %p155 = scmp.ne.s32.totalorder %s141, %s142
      %p156 = scmp.eq.s32.totalorder %s28, 1
      %p157 = por %p155, %p156
      %p159 = scmp.ne.s32.totalorder %s142, %s158
      %p160 = scmp.eq.s32.totalorder %s28, 0
      %p161 = por %p159, %p160
      %p162 = scmp.le.s32.totalorder 1, %s22
      %p163 = scmp.lt.s32.totalorder %s22, 3
      %p164 = pnand %p162, %p163
      %p165 = pneg %p164
      // Predicated region
      $region9: #{tpu_custom_call.1} parent=5 // pred_check
        _
      $region10: #{tpu_custom_call.1} parent=5 // pred_check_branch
        %167 = sbr.rel (%p164) target = $region12
      $region11: #{tpu_custom_call.1} parent=5 // pred_region
        %s168 = ssub.s32 %s22, 1
      $region12: #{tpu_custom_call.1} parent=5 // pred_fallthru
        _
      %p169 = scmp.lt.s32.totalorder %s22, 2
      // Predicated region
      $region13: #{tpu_custom_call.1} parent=5 // pred_check
        %p170 = pneg %p169
      $region14: #{tpu_custom_call.1} parent=5 // pred_check_branch
        %172 = sbr.rel (%p170) target = $region16
      $region15: #{tpu_custom_call.1} parent=5 // pred_region
        // Predicated region
        $region17: #{tpu_custom_call.1} parent=15 // pred_check
          %p173 = pneg %p58
        $region18: #{tpu_custom_call.1} parent=15 // pred_check_branch
          %175 = sbr.rel (%p173) target = $region20
        $region19: #{tpu_custom_call.1} parent=15 // pred_region
          %s176 = sand.u32 %s48, 1
          %s177 = scalar_lea.sflag [#allocation9], %s176
          %s178 = sand.u32 %s48, 1
          %s179 = smul.addr %s178, 8
          %s180 = scalar_lea.vmem [#allocation8], %s179
          %s181 = sld [smem:[#allocation6 + %s30]]
          %s182 = smul.u32 2, %s181
          %s184 = ssub.s32 128, 128
          %185 = vsyncadd %s177, %s184
          %s186 = smul.addr %s29, 2
          %s187 = sadd.s32 %s182, %s186
          %s188 = smul.addr %s187, 64
          %s189 = scalar_lea.hbm %s2, %s188
          %s190 = sshll.u32 %s180, 4
          %s191 = int_to_ptr.vmem [resolvable:$true] %s190
          %196 = dma.hbm_to_vmem [thread:$0]  %s189, 128, %s191, %s177, 64, 64, 4
        $region20: #{tpu_custom_call.1} parent=15 // pred_fallthru
          _
        // Predicated region
        $region21: #{tpu_custom_call.1} parent=15 // pred_check
          %p197 = pneg %p88
        $region22: #{tpu_custom_call.1} parent=15 // pred_check_branch
          %199 = sbr.rel (%p197) target = $region24
        $region23: #{tpu_custom_call.1} parent=15 // pred_region
          %s200 = sand.u32 %s22, 1
          %s201 = scalar_lea.sflag [#allocation12], %s200
          %s202 = sand.u32 %s78, 1
          %s203 = smul.addr %s202, 8
          %s204 = scalar_lea.vmem [#allocation11], %s203
          %s205 = sld [smem:[#allocation7 + %s30]]
          %s206 = smul.u32 2, %s205
          %s208 = ssub.s32 128, 128
          %209 = vsyncadd %s201, %s208
          %s210 = smul.addr %s29, 2
          %s211 = sadd.s32 %s206, %s210
          %s212 = smul.addr %s211, 64
          %s213 = scalar_lea.hbm %s3, %s212
          %s214 = sshll.u32 %s204, 4
          %s215 = int_to_ptr.vmem [resolvable:$true] %s214
          %220 = dma.hbm_to_vmem [thread:$0]  %s213, 128, %s215, %s201, 64, 64, 4
        $region24: #{tpu_custom_call.1} parent=15 // pred_fallthru
          _
        // Predicated region
        $region25: #{tpu_custom_call.1} parent=15 // pred_check
          %p221 = pneg %p118
        $region26: #{tpu_custom_call.1} parent=15 // pred_check_branch
          %223 = sbr.rel (%p221) target = $region28
        $region27: #{tpu_custom_call.1} parent=15 // pred_region
          %s224 = sand.u32 %s22, 1
          %s225 = scalar_lea.sflag [#allocation12], %s224
          %s226 = sand.u32 %s108, 1
          %s227 = smul.addr %s226, 8
          %s228 = scalar_lea.vmem [#allocation13], %s227
          %s229 = sld [smem:[#allocation7 + %s30]]
          %s230 = smul.u32 2, %s229
          %s232 = ssub.s32 128, 128
          %233 = vsyncadd %s225, %s232
          %s234 = smul.addr %s29, 2
          %s235 = sadd.s32 %s230, %s234
          %s236 = smul.addr %s235, 64
          %s237 = scalar_lea.hbm %s4, %s236
          %s238 = sshll.u32 %s228, 4
          %s239 = int_to_ptr.vmem [resolvable:$true] %s238
          %244 = dma.hbm_to_vmem [thread:$0]  %s237, 128, %s239, %s225, 64, 64, 4
        $region28: #{tpu_custom_call.1} parent=15 // pred_fallthru
          _
      $region16: #{tpu_custom_call.1} parent=5 // pred_fallthru
        _
      %p245 = scmp.le.s32.totalorder 1, %s22
      %p246 = scmp.lt.s32.totalorder %s22, 3
      %p247 = pnand %p245, %p246
      %p248 = pneg %p247
      // Predicated region
      $region29: #{tpu_custom_call.1} parent=5 // pred_check
        _
      $region30: #{tpu_custom_call.1} parent=5 // pred_check_branch
        %250 = sbr.rel (%p247) target = $region32
      $region31: #{tpu_custom_call.1} parent=5 // pred_region
        %s251 = ssub.s32 %s22, 1
        %s252 = sand.u32 %s51, 1
        %s253 = scalar_lea.sflag [#allocation9], %s252
        %s254 = sand.u32 %s51, 1
        %s255 = smul.addr %s254, 8
        %s256 = scalar_lea.vmem [#allocation8], %s255
        // Predicated region
        $region33: #{tpu_custom_call.1} parent=31 // pred_check
          %p257 = pneg %p64
        $region34: #{tpu_custom_call.1} parent=31 // pred_check_branch
          %259 = sbr.rel (%p257) target = $region36
        $region35: #{tpu_custom_call.1} parent=31 // pred_region
          %260 = dma.done %s253, 128
        $region36: #{tpu_custom_call.1} parent=31 // pred_fallthru
          _
        %s261 = sand.u32 %s27, 1
        %s262 = scalar_lea.sflag [#allocation12], %s261
        %s263 = sand.u32 %s81, 1
        %s264 = smul.addr %s263, 8
        %s265 = scalar_lea.vmem [#allocation11], %s264
        // Predicated region
        $region37: #{tpu_custom_call.1} parent=31 // pred_check
          %p266 = pneg %p94
        $region38: #{tpu_custom_call.1} parent=31 // pred_check_branch
          %268 = sbr.rel (%p266) target = $region40
        $region39: #{tpu_custom_call.1} parent=31 // pred_region
          %269 = dma.done %s262, 128
        $region40: #{tpu_custom_call.1} parent=31 // pred_fallthru
          _
        %s270 = sand.u32 %s27, 1
        %s271 = scalar_lea.sflag [#allocation12], %s270
        %s272 = sand.u32 %s111, 1
        %s273 = smul.addr %s272, 8
        %s274 = scalar_lea.vmem [#allocation13], %s273
        // Predicated region
        $region41: #{tpu_custom_call.1} parent=31 // pred_check
          %p275 = pneg %p124
        $region42: #{tpu_custom_call.1} parent=31 // pred_check_branch
          %277 = sbr.rel (%p275) target = $region44
        $region43: #{tpu_custom_call.1} parent=31 // pred_region
          %278 = dma.done %s271, 128
        $region44: #{tpu_custom_call.1} parent=31 // pred_fallthru
          _
        %s279 = sand.u32 %s51, 1
        %s280 = scalar_lea.sflag [#allocation9], %s279
        %s281 = sand.u32 %s51, 1
        %s282 = smul.addr %s281, 8
        %s283 = scalar_lea.vmem [#allocation8], %s282
        %p284 = pneg %p64
        %p285 = pneg %p61
        %s286 = sand.u32 %s27, 1
        %s287 = scalar_lea.sflag [#allocation12], %s286
        %s288 = sand.u32 %s81, 1
        %s289 = smul.addr %s288, 8
        %s290 = scalar_lea.vmem [#allocation11], %s289
        %p291 = pneg %p94
        %p292 = pneg %p91
        %s293 = sand.u32 %s27, 1
        %s294 = scalar_lea.sflag [#allocation12], %s293
        %s295 = sand.u32 %s111, 1
        %s296 = smul.addr %s295, 8
        %s297 = scalar_lea.vmem [#allocation13], %s296
        %p298 = pneg %p124
        %p299 = pneg %p121
        %p300 = pneg %p154
        %p301 = pneg %p151
        %s302 = sand.u32 %s141, 1
        %s303 = scalar_lea.sflag [#allocation10], %s302
        %s304 = sand.u32 %s141, 1
        %s305 = smul.addr %s304, 8
        %s306 = scalar_lea.vmem [#allocation14], %s305
        %s307 = sld [smem:[#allocation6 + %s32]]
        %s308 = smul.u32 2, %s307
        %s309 = sld [smem:[#allocation7 + %s32]]
        %s310 = smul.u32 2, %s309
        %s311 = sld [smem:[#allocation7 + %s32]]
        %s312 = smul.u32 2, %s311
        %s313 = sld [smem:[#allocation6 + %s32]]
        %s314 = smul.u32 2, %s313
        %s316 = sld [smem:[#allocation6 + %s32]]
        %s317 = sld [smem:[#allocation7 + %s32]]
        %p318 = scmp.eq.s32.totalorder %s317, 0
        // Predicated region
        $region45: #{tpu_custom_call.1} parent=31 // pred_check
          %p319 = pneg %p318
        $region46: #{tpu_custom_call.1} parent=31 // pred_check_branch
          %321 = sbr.rel (%p319) target = $region48
        $region47: #{tpu_custom_call.1} parent=31 // pred_region
          %vm322 = vcmask 7168
          %323 = vst.msk [vmem:[#allocation2] sm:$0xff] %vm322, -1e+30
          %324 = vst.msk [vmem:[#allocation2 + $0x8] sm:$0xff] %vm322, -1e+30
          %325 = vst.msk [vmem:[#allocation2 + $0x10] sm:$0xff] %vm322, -1e+30
          %326 = vst.msk [vmem:[#allocation2 + $0x18] sm:$0xff] %vm322, -1e+30
          %327 = vst.msk [vmem:[#allocation3] sm:$0xff] %vm322, 0.0
          %328 = vst.msk [vmem:[#allocation3 + $0x8] sm:$0xff] %vm322, 0.0
          %329 = vst.msk [vmem:[#allocation3 + $0x10] sm:$0xff] %vm322, 0.0
          %330 = vst.msk [vmem:[#allocation3 + $0x18] sm:$0xff] %vm322, 0.0
          %vm331 = vcmask 261120
          %332 = vst.msk [vmem:[#allocation4] sm:$0xff] %vm331, 0.0
          %333 = vst.msk [vmem:[#allocation4 + $0x8] sm:$0xff] %vm331, 0.0
        $region48: #{tpu_custom_call.1} parent=31 // pred_fallthru
          _
        %p334 = scmp.lt.s32.totalorder %s317, %s316
        // Predicated region
        $region49: #{tpu_custom_call.1} parent=31 // pred_check
          %p335 = pneg %p334
        $region50: #{tpu_custom_call.1} parent=31 // pred_check_branch
          %337 = sbr.rel (%p335) target = $region52
        $region51: #{tpu_custom_call.1} parent=31 // pred_region
          %v338 = vld [vmem:[%s256] sm:$0xf]
          %v339 = vld [vmem:[%s256 + $0x4] sm:$0xf]
          %v340 = vld [vmem:[%s265] sm:$0xf]
          %v341 = vld [vmem:[%s265 + $0x4] sm:$0xf]
          %v342 = vld [vmem:[%s274] sm:$0xf]
          %v343 = vld [vmem:[%s274 + $0x4] sm:$0xf]
          %v346 = vunpack.c.l.b16 %v338
          %v347 = vunpack.c.l.b16 %v339
          %v348 = vpack.c.b16 %v347, %v346
          %v351 = vunpack.c.l.b16 %v340
          %v352 = vunpack.c.l.b16 %v341
          %v353 = vpack.c.b16 %v352, %v351
          %vm354 = vcmask 130048
          %v356 = vsel %vm354, %v348, 0
          %v359 = vsel %vm354, %v353, 0
          %361 = vmatprep.subr.bf16.mxu0 0
          %362 = vmatpush1.bf16.xpose.msra.mxu0 0
          %363 = vmatprep.subr.bf16.mxu0 0
          %364 = vmatpush1.bf16.xpose.msra.mxu0 0
          %365 = vmatprep.subr.bf16.mxu0 0
          %366 = vmatpush1.bf16.xpose.msra.mxu0 0
          %367 = vmatprep.subr.bf16.mxu0 0
          %368 = vmatpush1.bf16.xpose.msra.mxu0 0
          %369 = vmatprep.subr.bf16.mxu0 0
          %370 = vmatpush1.bf16.xpose.msra.mxu0 0
          %371 = vmatprep.subr.bf16.mxu0 0
          %372 = vmatpush1.bf16.xpose.msra.mxu0 0
          %373 = vmatprep.subr.bf16.mxu0 0
          %374 = vmatpush1.bf16.xpose.msra.mxu0 0
          %375 = vmatprep.subr.bf16.mxu0 0
          %376 = vmatpush1.bf16.xpose.msra.mxu0 %v359
          %377 = vmatprep.subr.bf16.mxu0 0
          %378 = vmatpush2.bf16.xpose.msra.mxu0 0
          %379 = vmatprep.subr.bf16.mxu0 0
          %380 = vmatpush2.bf16.xpose.msra.mxu0 0
          %381 = vmatprep.subr.bf16.mxu0 0
          %382 = vmatpush2.bf16.xpose.msra.mxu0 0
          %383 = vmatprep.subr.bf16.mxu0 0
          %384 = vmatpush2.bf16.xpose.msra.mxu0 0
          %385 = vmatprep.subr.bf16.mxu0 0
          %386 = vmatpush2.bf16.xpose.msra.mxu0 0
          %387 = vmatprep.subr.bf16.mxu0 0
          %388 = vmatpush2.bf16.xpose.msra.mxu0 0
          %389 = vmatprep.subr.bf16.mxu0 0
          %390 = vmatpush2.bf16.xpose.msra.mxu0 0
          %391 = vmatprep.subr.bf16.mxu0 0
          %392 = vmatpush2.bf16.xpose.msra.mxu0 0
          %393 = vmatprep.mubr.bf16.mxu0 0
          %394 = vmatmul.mubr.bf16.gmra.mxu0 %v356
          %v395 = vpop.f32.mrf.mxu0
          %v396 = vadd.f32 0.0, %v395
          %v397 = vpop.f32.mrf.mxu0
          %v398 = vpop.f32.mrf.mxu0
          %v399 = vadd.f32 0.0, %v398
          %v400 = vpop.f32.mrf.mxu0
          %401 = vdwg.mxu0
          %v402 = vld [vmem:[#allocation2] sm:$0xff]
          %v403 = vld [vmem:[#allocation2 + $0x8] sm:$0xff]
          %v404 = vsel %vm354, %v396, -inf
          %405 = vmax.xlane.f32.xlu0 %v404
          %v406 = vpop.xlane.xlu0 %405
          %v407 = vsel %vm354, %v399, -inf
          %408 = vmax.xlane.f32.xlu0 %v407
          %v409 = vpop.xlane.xlu0 %408
          %v410 = vmax.f32 %v402, %v406
          %v411 = vmax.f32 %v403, %v409
          %v412 = vsub.f32 %v402, %v410
          %v413 = vsub.f32 %v403, %v411
          %v414 = vmul.f32 %v412, 1.442695
          %v415 = vpow.pop %v414
          %v416 = vmul.f32 %v413, 1.442695
          %v417 = vpow.pop %v416
          %419 = vset.pattern.permute.xlu0 0
          %420 = vperm.xlu0 %419, %v410
          %v421 = vpop.permute.xlu0 %420
          %424 = vset.pattern.permute.xlu0 0
          %425 = vperm.xlu0 %424, %v411
          %v426 = vpop.permute.xlu0 %425
          %v428 = vsub.f32 %v396, %v421
          %v429 = vsub.f32 %v399, %v426
          %v430 = vmul.f32 %v428, 1.442695
          %v431 = vpow.pop %v430
          %v432 = vmul.f32 %v429, 1.442695
          %v433 = vpow.pop %v432
          %v434 = vld [vmem:[#allocation3] sm:$0xff]
          %v435 = vld [vmem:[#allocation3 + $0x8] sm:$0xff]
          %v436 = vmul.f32 %v415, %v434
          %v437 = vmul.f32 %v417, %v435
          %v438 = vsel %vm354, %v431, 0.0
          %439 = vadd.xlane.f32.xlu0 %v438
          %v440 = vpop.xlane.xlu0 %439
          %v441 = vsel %vm354, %v433, 0.0
          %442 = vadd.xlane.f32.xlu0 %v441
          %v443 = vpop.xlane.xlu0 %442
          %v444 = vadd.f32 %v436, %v440
          %v445 = vadd.f32 %v437, %v443
          %vm446 = vcmask 7168
          %447 = vst.msk [vmem:[#allocation3] sm:$0xff] %vm446, %v444
          %448 = vst.msk [vmem:[#allocation3 + $0x8] sm:$0xff] %vm446, %v445
          %v449 = vld [vmem:[#allocation4] sm:$0xff]
          %v450 = vld [vmem:[#allocation4 + $0x8] sm:$0xff]
          %452 = vset.pattern.permute.xlu0 0
          %453 = vperm.xlu0 %452, %v415
          %v454 = vpop.permute.xlu0 %453
          %457 = vset.pattern.permute.xlu0 0
          %458 = vperm.xlu0 %457, %v417
          %v459 = vpop.permute.xlu0 %458
          %v461 = vmul.f32 %v454, %v449
          %v462 = vmul.f32 %v459, %v450
          %v463 = vpack.c.bf16 %v433, %v431
          %v466 = vunpack.c.l.b16 %v342
          %v467 = vunpack.c.l.b16 %v343
          %v468 = vpack.c.b16 %v467, %v466
          %v471 = vsel %vm354, %v463, 0
          %473 = vmatprep.subr.bf16.mxu0 0
          %474 = vmatpush1.bf16.msra.mxu0 0
          %475 = vmatprep.subr.bf16.mxu0 0
          %476 = vmatpush1.bf16.msra.mxu0 0
          %477 = vmatprep.subr.bf16.mxu0 0
          %478 = vmatpush1.bf16.msra.mxu0 0
          %479 = vmatprep.subr.bf16.mxu0 0
          %480 = vmatpush1.bf16.msra.mxu0 0
          %481 = vmatprep.subr.bf16.mxu0 0
          %482 = vmatpush1.bf16.msra.mxu0 0
          %483 = vmatprep.subr.bf16.mxu0 0
          %484 = vmatpush1.bf16.msra.mxu0 0
          %485 = vmatprep.subr.bf16.mxu0 0
          %486 = vmatpush1.bf16.msra.mxu0 0
          %487 = vmatprep.subr.bf16.mxu0 0
          %488 = vmatpush1.bf16.msra.mxu0 %v468
          %489 = vmatprep.subr.bf16.mxu0 0
          %490 = vmatpush2.bf16.msra.mxu0 0
          %491 = vmatprep.subr.bf16.mxu0 0
          %492 = vmatpush2.bf16.msra.mxu0 0
          %493 = vmatprep.subr.bf16.mxu0 0
          %494 = vmatpush2.bf16.msra.mxu0 0
          %495 = vmatprep.subr.bf16.mxu0 0
          %496 = vmatpush2.bf16.msra.mxu0 0
          %497 = vmatprep.subr.bf16.mxu0 0
          %498 = vmatpush2.bf16.msra.mxu0 0
          %499 = vmatprep.subr.bf16.mxu0 0
          %500 = vmatpush2.bf16.msra.mxu0 0
          %501 = vmatprep.subr.bf16.mxu0 0
          %502 = vmatpush2.bf16.msra.mxu0 0
          %503 = vmatprep.subr.bf16.mxu0 0
          %504 = vmatpush2.bf16.msra.mxu0 0
          %505 = vmatprep.mubr.bf16.mxu0 0
          %506 = vmatmul.mubr.bf16.gmra.mxu0 %v471
          %v507 = vpop.f32.mrf.mxu0
          %v508 = vadd.f32 0.0, %v507
          %v509 = vpop.f32.mrf.mxu0
          %v510 = vpop.f32.mrf.mxu0
          %v511 = vadd.f32 0.0, %v510
          %v512 = vpop.f32.mrf.mxu0
          %513 = vdwg.mxu0
          %v514 = vadd.f32 %v461, %v508
          %v515 = vadd.f32 %v462, %v511
          %516 = vst.msk [vmem:[#allocation4] sm:$0xff] %vm354, %v514
          %517 = vst.msk [vmem:[#allocation4 + $0x8] sm:$0xff] %vm354, %v515
          %518 = vst.msk [vmem:[#allocation2] sm:$0xff] %vm446, %v410
          %519 = vst.msk [vmem:[#allocation2 + $0x8] sm:$0xff] %vm446, %v411
          %v520 = vld [vmem:[%s256] sm:$0xf]
          %v521 = vld [vmem:[%s256 + $0x4] sm:$0xf]
          %v522 = vld [vmem:[%s265] sm:$0xf]
          %v523 = vld [vmem:[%s265 + $0x4] sm:$0xf]
          %v524 = vld [vmem:[%s274] sm:$0xf]
          %v525 = vld [vmem:[%s274 + $0x4] sm:$0xf]
          %v528 = vunpack.c.l.b16 %v520
          %v529 = vunpack.c.l.b16 %v521
          %v530 = vpack.c.b16 %v529, %v528
          %531 = vrot.lane.b32.xlu0 %v530, 112
          %v532 = vpop.permute.xlu0 %531
          %v535 = vunpack.c.l.b16 %v522
          %v536 = vunpack.c.l.b16 %v523
          %v537 = vpack.c.b16 %v536, %v535
          %538 = vrot.lane.b32.xlu0 %v537, 112
          %v539 = vpop.permute.xlu0 %538
          %v541 = vsel %vm354, %v532, 0
          %v544 = vsel %vm354, %v539, 0
          %546 = vmatprep.subr.bf16.mxu0 0
          %547 = vmatpush1.bf16.xpose.msra.mxu0 0
          %548 = vmatprep.subr.bf16.mxu0 0
          %549 = vmatpush1.bf16.xpose.msra.mxu0 0
          %550 = vmatprep.subr.bf16.mxu0 0
          %551 = vmatpush1.bf16.xpose.msra.mxu0 0
          %552 = vmatprep.subr.bf16.mxu0 0
          %553 = vmatpush1.bf16.xpose.msra.mxu0 0
          %554 = vmatprep.subr.bf16.mxu0 0
          %555 = vmatpush1.bf16.xpose.msra.mxu0 0
          %556 = vmatprep.subr.bf16.mxu0 0
          %557 = vmatpush1.bf16.xpose.msra.mxu0 0
          %558 = vmatprep.subr.bf16.mxu0 0
          %559 = vmatpush1.bf16.xpose.msra.mxu0 0
          %560 = vmatprep.subr.bf16.mxu0 0
          %561 = vmatpush1.bf16.xpose.msra.mxu0 %v544
          %562 = vmatprep.subr.bf16.mxu0 0
          %563 = vmatpush2.bf16.xpose.msra.mxu0 0
          %564 = vmatprep.subr.bf16.mxu0 0
          %565 = vmatpush2.bf16.xpose.msra.mxu0 0
          %566 = vmatprep.subr.bf16.mxu0 0
          %567 = vmatpush2.bf16.xpose.msra.mxu0 0
          %568 = vmatprep.subr.bf16.mxu0 0
          %569 = vmatpush2.bf16.xpose.msra.mxu0 0
          %570 = vmatprep.subr.bf16.mxu0 0
          %571 = vmatpush2.bf16.xpose.msra.mxu0 0
          %572 = vmatprep.subr.bf16.mxu0 0
          %573 = vmatpush2.bf16.xpose.msra.mxu0 0
          %574 = vmatprep.subr.bf16.mxu0 0
          %575 = vmatpush2.bf16.xpose.msra.mxu0 0
          %576 = vmatprep.subr.bf16.mxu0 0
          %577 = vmatpush2.bf16.xpose.msra.mxu0 0
          %578 = vmatprep.mubr.bf16.mxu0 0
          %579 = vmatmul.mubr.bf16.gmra.mxu0 %v541
          %v580 = vpop.f32.mrf.mxu0
          %v581 = vadd.f32 0.0, %v580
          %v582 = vpop.f32.mrf.mxu0
          %v583 = vpop.f32.mrf.mxu0
          %v584 = vadd.f32 0.0, %v583
          %v585 = vpop.f32.mrf.mxu0
          %586 = vdwg.mxu0
          %s587 = scalar_lea.vmem [#allocation2], 16
          %v588 = vld [vmem:[%s587] sm:$0xff]
          %v589 = vld [vmem:[%s587 + $0x8] sm:$0xff]
          %v590 = vsel %vm354, %v581, -inf
          %591 = vmax.xlane.f32.xlu0 %v590
          %v592 = vpop.xlane.xlu0 %591
          %v593 = vsel %vm354, %v584, -inf
          %594 = vmax.xlane.f32.xlu0 %v593
          %v595 = vpop.xlane.xlu0 %594
          %v596 = vmax.f32 %v588, %v592
          %v597 = vmax.f32 %v589, %v595
          %v598 = vsub.f32 %v588, %v596
          %v599 = vsub.f32 %v589, %v597
          %v600 = vmul.f32 %v598, 1.442695
          %v601 = vpow.pop %v600
          %v602 = vmul.f32 %v599, 1.442695
          %v603 = vpow.pop %v602
          %605 = vset.pattern.permute.xlu0 0
          %606 = vperm.xlu0 %605, %v596
          %v607 = vpop.permute.xlu0 %606
          %610 = vset.pattern.permute.xlu0 0
          %611 = vperm.xlu0 %610, %v597
          %v612 = vpop.permute.xlu0 %611
          %v614 = vsub.f32 %v581, %v607
          %v615 = vsub.f32 %v584, %v612
          %v616 = vmul.f32 %v614, 1.442695
          %v617 = vpow.pop %v616
          %v618 = vmul.f32 %v615, 1.442695
          %v619 = vpow.pop %v618
          %s620 = scalar_lea.vmem [#allocation3], 16
          %v621 = vld [vmem:[%s620] sm:$0xff]
          %v622 = vld [vmem:[%s620 + $0x8] sm:$0xff]
          %v623 = vmul.f32 %v601, %v621
          %v624 = vmul.f32 %v603, %v622
          %v625 = vsel %vm354, %v617, 0.0
          %626 = vadd.xlane.f32.xlu0 %v625
          %v627 = vpop.xlane.xlu0 %626
          %v628 = vsel %vm354, %v619, 0.0
          %629 = vadd.xlane.f32.xlu0 %v628
          %v630 = vpop.xlane.xlu0 %629
          %v631 = vadd.f32 %v623, %v627
          %v632 = vadd.f32 %v624, %v630
          %633 = vst.msk [vmem:[%s620] sm:$0xff] %vm446, %v631
          %634 = vst.msk [vmem:[%s620 + $0x8] sm:$0xff] %vm446, %v632
          %v635 = vld [vmem:[#allocation4] sm:$0xff]
          %v636 = vld [vmem:[#allocation4 + $0x8] sm:$0xff]
          %638 = vset.pattern.permute.xlu0 0
          %639 = vperm.xlu0 %638, %v601
          %v640 = vpop.permute.xlu0 %639
          %643 = vset.pattern.permute.xlu0 0
          %644 = vperm.xlu0 %643, %v603
          %v645 = vpop.permute.xlu0 %644
          %v647 = vmul.f32 %v640, %v635
          %v648 = vmul.f32 %v645, %v636
          %v649 = vpack.c.bf16 %v619, %v617
          %v652 = vunpack.c.l.b16 %v524
          %v653 = vunpack.c.l.b16 %v525
          %v654 = vpack.c.b16 %v653, %v652
          %655 = vrot.lane.b32.xlu0 %v654, 112
          %v656 = vpop.permute.xlu0 %655
          %v659 = vsel %vm354, %v649, 0
          %661 = vmatprep.subr.bf16.mxu0 0
          %662 = vmatpush1.bf16.msra.mxu0 0
          %663 = vmatprep.subr.bf16.mxu0 0
          %664 = vmatpush1.bf16.msra.mxu0 0
          %665 = vmatprep.subr.bf16.mxu0 0
          %666 = vmatpush1.bf16.msra.mxu0 0
          %667 = vmatprep.subr.bf16.mxu0 0
          %668 = vmatpush1.bf16.msra.mxu0 0
          %669 = vmatprep.subr.bf16.mxu0 0
          %670 = vmatpush1.bf16.msra.mxu0 0
          %671 = vmatprep.subr.bf16.mxu0 0
          %672 = vmatpush1.bf16.msra.mxu0 0
          %673 = vmatprep.subr.bf16.mxu0 0
          %674 = vmatpush1.bf16.msra.mxu0 0
          %675 = vmatprep.subr.bf16.mxu0 0
          %676 = vmatpush1.bf16.msra.mxu0 %v656
          %677 = vmatprep.subr.bf16.mxu0 0
          %678 = vmatpush2.bf16.msra.mxu0 0
          %679 = vmatprep.subr.bf16.mxu0 0
          %680 = vmatpush2.bf16.msra.mxu0 0
          %681 = vmatprep.subr.bf16.mxu0 0
          %682 = vmatpush2.bf16.msra.mxu0 0
          %683 = vmatprep.subr.bf16.mxu0 0
          %684 = vmatpush2.bf16.msra.mxu0 0
          %685 = vmatprep.subr.bf16.mxu0 0
          %686 = vmatpush2.bf16.msra.mxu0 0
          %687 = vmatprep.subr.bf16.mxu0 0
          %688 = vmatpush2.bf16.msra.mxu0 0
          %689 = vmatprep.subr.bf16.mxu0 0
          %690 = vmatpush2.bf16.msra.mxu0 0
          %691 = vmatprep.subr.bf16.mxu0 0
          %692 = vmatpush2.bf16.msra.mxu0 0
          %693 = vmatprep.mubr.bf16.mxu0 0
          %694 = vmatmul.mubr.bf16.gmra.mxu0 %v659
          %v695 = vpop.f32.mrf.mxu0
          %v696 = vadd.f32 0.0, %v695
          %v697 = vpop.f32.mrf.mxu0
          %v698 = vpop.f32.mrf.mxu0
          %v699 = vadd.f32 0.0, %v698
          %v700 = vpop.f32.mrf.mxu0
          %701 = vdwg.mxu0
          %704 = vrot.lane.b32.xlu0 %v696, 16
          %v705 = vpop.permute.xlu0 %704
          %706 = vrot.lane.b32.xlu0 %v699, 16
          %v707 = vpop.permute.xlu0 %706
          %v710 = vadd.f32 %v647, %v705
          %v711 = vadd.f32 %v648, %v707
          %vm712 = vcmask 261248
          %713 = vst.msk [vmem:[#allocation4] sm:$0xff] %vm712, %v710
          %714 = vst.msk [vmem:[#allocation4 + $0x8] sm:$0xff] %vm712, %v711
          %715 = vst.msk [vmem:[%s587] sm:$0xff] %vm446, %v596
          %716 = vst.msk [vmem:[%s587 + $0x8] sm:$0xff] %vm446, %v597
        $region52: #{tpu_custom_call.1} parent=31 // pred_fallthru
          _
        %p717 = scmp.eq.s32.totalorder %s317, %s316
        // Predicated region
        $region53: #{tpu_custom_call.1} parent=31 // pred_check
          %p718 = pneg %p717
        $region54: #{tpu_custom_call.1} parent=31 // pred_check_branch
          %720 = sbr.rel (%p718) target = $region56
        $region55: #{tpu_custom_call.1} parent=31 // pred_region
          %v721 = vlaneseq
          %v722 = vshrl.u32 %v721, 7
          %v723 = vadd.s32 %v722, 8
          %v724 = vlaneseq
          %v725 = vand.u32 %v724, 127
          %vm726 = vcmp.gt.s32.totalorder %v725, %v722
          %vm727 = vcmp.gt.s32.totalorder %v725, %v723
          %v728 = vsel %vm726, -1e+30, 0.0
          %v729 = vsel %vm727, -1e+30, 0.0
          %v730 = vld [vmem:[%s256] sm:$0xf]
          %v731 = vld [vmem:[%s256 + $0x4] sm:$0xf]
          %v732 = vld [vmem:[%s265] sm:$0xf]
          %v733 = vld [vmem:[%s265 + $0x4] sm:$0xf]
          %v734 = vld [vmem:[%s274] sm:$0xf]
          %v735 = vld [vmem:[%s274 + $0x4] sm:$0xf]
          %v738 = vunpack.c.l.b16 %v730
          %v739 = vunpack.c.l.b16 %v731
          %v740 = vpack.c.b16 %v739, %v738
          %v743 = vunpack.c.l.b16 %v732
          %v744 = vunpack.c.l.b16 %v733
          %v745 = vpack.c.b16 %v744, %v743
          %vm746 = vcmask 130048
          %v748 = vsel %vm746, %v740, 0
          %v751 = vsel %vm746, %v745, 0
          %753 = vmatprep.subr.bf16.mxu0 0
          %754 = vmatpush1.bf16.xpose.msra.mxu0 0
          %755 = vmatprep.subr.bf16.mxu0 0
          %756 = vmatpush1.bf16.xpose.msra.mxu0 0
          %757 = vmatprep.subr.bf16.mxu0 0
          %758 = vmatpush1.bf16.xpose.msra.mxu0 0
          %759 = vmatprep.subr.bf16.mxu0 0
          %760 = vmatpush1.bf16.xpose.msra.mxu0 0
          %761 = vmatprep.subr.bf16.mxu0 0
          %762 = vmatpush1.bf16.xpose.msra.mxu0 0
          %763 = vmatprep.subr.bf16.mxu0 0
          %764 = vmatpush1.bf16.xpose.msra.mxu0 0
          %765 = vmatprep.subr.bf16.mxu0 0
          %766 = vmatpush1.bf16.xpose.msra.mxu0 0
          %767 = vmatprep.subr.bf16.mxu0 0
          %768 = vmatpush1.bf16.xpose.msra.mxu0 %v751
          %769 = vmatprep.subr.bf16.mxu0 0
          %770 = vmatpush2.bf16.xpose.msra.mxu0 0
          %771 = vmatprep.subr.bf16.mxu0 0
          %772 = vmatpush2.bf16.xpose.msra.mxu0 0
          %773 = vmatprep.subr.bf16.mxu0 0
          %774 = vmatpush2.bf16.xpose.msra.mxu0 0
          %775 = vmatprep.subr.bf16.mxu0 0
          %776 = vmatpush2.bf16.xpose.msra.mxu0 0
          %777 = vmatprep.subr.bf16.mxu0 0
          %778 = vmatpush2.bf16.xpose.msra.mxu0 0
          %779 = vmatprep.subr.bf16.mxu0 0
          %780 = vmatpush2.bf16.xpose.msra.mxu0 0
          %781 = vmatprep.subr.bf16.mxu0 0
          %782 = vmatpush2.bf16.xpose.msra.mxu0 0
          %783 = vmatprep.subr.bf16.mxu0 0
          %784 = vmatpush2.bf16.xpose.msra.mxu0 0
          %785 = vmatprep.mubr.bf16.mxu0 0
          %786 = vmatmul.mubr.bf16.gmra.mxu0 %v748
          %v787 = vpop.f32.mrf.mxu0
          %v788 = vadd.f32 %v728, %v787
          %v789 = vpop.f32.mrf.mxu0
          %v790 = vpop.f32.mrf.mxu0
          %v791 = vadd.f32 %v729, %v790
          %v792 = vpop.f32.mrf.mxu0
          %793 = vdwg.mxu0
          %v794 = vld [vmem:[#allocation2] sm:$0xff]
          %v795 = vld [vmem:[#allocation2 + $0x8] sm:$0xff]
          %v796 = vsel %vm746, %v788, -inf
          %797 = vmax.xlane.f32.xlu0 %v796
          %v798 = vpop.xlane.xlu0 %797
          %v799 = vsel %vm746, %v791, -inf
          %800 = vmax.xlane.f32.xlu0 %v799
          %v801 = vpop.xlane.xlu0 %800
          %v802 = vmax.f32 %v794, %v798
          %v803 = vmax.f32 %v795, %v801
          %v804 = vsub.f32 %v794, %v802
          %v805 = vsub.f32 %v795, %v803
          %v806 = vmul.f32 %v804, 1.442695
          %v807 = vpow.pop %v806
          %v808 = vmul.f32 %v805, 1.442695
          %v809 = vpow.pop %v808
          %811 = vset.pattern.permute.xlu0 0
          %812 = vperm.xlu0 %811, %v802
          %v813 = vpop.permute.xlu0 %812
          %816 = vset.pattern.permute.xlu0 0
          %817 = vperm.xlu0 %816, %v803
          %v818 = vpop.permute.xlu0 %817
          %v820 = vsub.f32 %v788, %v813
          %v821 = vsub.f32 %v791, %v818
          %v822 = vmul.f32 %v820, 1.442695
          %v823 = vpow.pop %v822
          %v824 = vmul.f32 %v821, 1.442695
          %v825 = vpow.pop %v824
          %v826 = vld [vmem:[#allocation3] sm:$0xff]
          %v827 = vld [vmem:[#allocation3 + $0x8] sm:$0xff]
          %v828 = vmul.f32 %v807, %v826
          %v829 = vmul.f32 %v809, %v827
          %v830 = vsel %vm746, %v823, 0.0
          %831 = vadd.xlane.f32.xlu0 %v830
          %v832 = vpop.xlane.xlu0 %831
          %v833 = vsel %vm746, %v825, 0.0
          %834 = vadd.xlane.f32.xlu0 %v833
          %v835 = vpop.xlane.xlu0 %834
          %v836 = vadd.f32 %v828, %v832
          %v837 = vadd.f32 %v829, %v835
          %vm838 = vcmask 7168
          %839 = vst.msk [vmem:[#allocation3] sm:$0xff] %vm838, %v836
          %840 = vst.msk [vmem:[#allocation3 + $0x8] sm:$0xff] %vm838, %v837
          %v841 = vld [vmem:[#allocation4] sm:$0xff]
          %v842 = vld [vmem:[#allocation4 + $0x8] sm:$0xff]
          %844 = vset.pattern.permute.xlu0 0
          %845 = vperm.xlu0 %844, %v807
          %v846 = vpop.permute.xlu0 %845
          %849 = vset.pattern.permute.xlu0 0
          %850 = vperm.xlu0 %849, %v809
          %v851 = vpop.permute.xlu0 %850
          %v853 = vmul.f32 %v846, %v841
          %v854 = vmul.f32 %v851, %v842
          %v855 = vpack.c.bf16 %v825, %v823
          %v858 = vunpack.c.l.b16 %v734
          %v859 = vunpack.c.l.b16 %v735
          %v860 = vpack.c.b16 %v859, %v858
          %v863 = vsel %vm746, %v855, 0
          %865 = vmatprep.subr.bf16.mxu0 0
          %866 = vmatpush1.bf16.msra.mxu0 0
          %867 = vmatprep.subr.bf16.mxu0 0
          %868 = vmatpush1.bf16.msra.mxu0 0
          %869 = vmatprep.subr.bf16.mxu0 0
          %870 = vmatpush1.bf16.msra.mxu0 0
          %871 = vmatprep.subr.bf16.mxu0 0
          %872 = vmatpush1.bf16.msra.mxu0 0
          %873 = vmatprep.subr.bf16.mxu0 0
          %874 = vmatpush1.bf16.msra.mxu0 0
          %875 = vmatprep.subr.bf16.mxu0 0
          %876 = vmatpush1.bf16.msra.mxu0 0
          %877 = vmatprep.subr.bf16.mxu0 0
          %878 = vmatpush1.bf16.msra.mxu0 0
          %879 = vmatprep.subr.bf16.mxu0 0
          %880 = vmatpush1.bf16.msra.mxu0 %v860
          %881 = vmatprep.subr.bf16.mxu0 0
          %882 = vmatpush2.bf16.msra.mxu0 0
          %883 = vmatprep.subr.bf16.mxu0 0
          %884 = vmatpush2.bf16.msra.mxu0 0
          %885 = vmatprep.subr.bf16.mxu0 0
          %886 = vmatpush2.bf16.msra.mxu0 0
          %887 = vmatprep.subr.bf16.mxu0 0
          %888 = vmatpush2.bf16.msra.mxu0 0
          %889 = vmatprep.subr.bf16.mxu0 0
          %890 = vmatpush2.bf16.msra.mxu0 0
          %891 = vmatprep.subr.bf16.mxu0 0
          %892 = vmatpush2.bf16.msra.mxu0 0
          %893 = vmatprep.subr.bf16.mxu0 0
          %894 = vmatpush2.bf16.msra.mxu0 0
          %895 = vmatprep.subr.bf16.mxu0 0
          %896 = vmatpush2.bf16.msra.mxu0 0
          %897 = vmatprep.mubr.bf16.mxu0 0
          %898 = vmatmul.mubr.bf16.gmra.mxu0 %v863
          %v899 = vpop.f32.mrf.mxu0
          %v900 = vadd.f32 0.0, %v899
          %v901 = vpop.f32.mrf.mxu0
          %v902 = vpop.f32.mrf.mxu0
          %v903 = vadd.f32 0.0, %v902
          %v904 = vpop.f32.mrf.mxu0
          %905 = vdwg.mxu0
          %v906 = vadd.f32 %v853, %v900
          %v907 = vadd.f32 %v854, %v903
          %908 = vst.msk [vmem:[#allocation4] sm:$0xff] %vm746, %v906
          %909 = vst.msk [vmem:[#allocation4 + $0x8] sm:$0xff] %vm746, %v907
          %910 = vst.msk [vmem:[#allocation2] sm:$0xff] %vm838, %v802
          %911 = vst.msk [vmem:[#allocation2 + $0x8] sm:$0xff] %vm838, %v803
          %v912 = vld [vmem:[%s256] sm:$0xf]
          %v913 = vld [vmem:[%s256 + $0x4] sm:$0xf]
          %v914 = vld [vmem:[%s265] sm:$0xf]
          %v915 = vld [vmem:[%s265 + $0x4] sm:$0xf]
          %v916 = vld [vmem:[%s274] sm:$0xf]
          %v917 = vld [vmem:[%s274 + $0x4] sm:$0xf]
          %v920 = vunpack.c.l.b16 %v912
          %v921 = vunpack.c.l.b16 %v913
          %v922 = vpack.c.b16 %v921, %v920
          %923 = vrot.lane.b32.xlu0 %v922, 112
          %v924 = vpop.permute.xlu0 %923
          %v927 = vunpack.c.l.b16 %v914
          %v928 = vunpack.c.l.b16 %v915
          %v929 = vpack.c.b16 %v928, %v927
          %930 = vrot.lane.b32.xlu0 %v929, 112
          %v931 = vpop.permute.xlu0 %930
          %v933 = vsel %vm746, %v924, 0
          %v936 = vsel %vm746, %v931, 0
          %938 = vmatprep.subr.bf16.mxu0 0
          %939 = vmatpush1.bf16.xpose.msra.mxu0 0
          %940 = vmatprep.subr.bf16.mxu0 0
          %941 = vmatpush1.bf16.xpose.msra.mxu0 0
          %942 = vmatprep.subr.bf16.mxu0 0
          %943 = vmatpush1.bf16.xpose.msra.mxu0 0
          %944 = vmatprep.subr.bf16.mxu0 0
          %945 = vmatpush1.bf16.xpose.msra.mxu0 0
          %946 = vmatprep.subr.bf16.mxu0 0
          %947 = vmatpush1.bf16.xpose.msra.mxu0 0
          %948 = vmatprep.subr.bf16.mxu0 0
          %949 = vmatpush1.bf16.xpose.msra.mxu0 0
          %950 = vmatprep.subr.bf16.mxu0 0
          %951 = vmatpush1.bf16.xpose.msra.mxu0 0
          %952 = vmatprep.subr.bf16.mxu0 0
          %953 = vmatpush1.bf16.xpose.msra.mxu0 %v936
          %954 = vmatprep.subr.bf16.mxu0 0
          %955 = vmatpush2.bf16.xpose.msra.mxu0 0
          %956 = vmatprep.subr.bf16.mxu0 0
          %957 = vmatpush2.bf16.xpose.msra.mxu0 0
          %958 = vmatprep.subr.bf16.mxu0 0
          %959 = vmatpush2.bf16.xpose.msra.mxu0 0
          %960 = vmatprep.subr.bf16.mxu0 0
          %961 = vmatpush2.bf16.xpose.msra.mxu0 0
          %962 = vmatprep.subr.bf16.mxu0 0
          %963 = vmatpush2.bf16.xpose.msra.mxu0 0
          %964 = vmatprep.subr.bf16.mxu0 0
          %965 = vmatpush2.bf16.xpose.msra.mxu0 0
          %966 = vmatprep.subr.bf16.mxu0 0
          %967 = vmatpush2.bf16.xpose.msra.mxu0 0
          %968 = vmatprep.subr.bf16.mxu0 0
          %969 = vmatpush2.bf16.xpose.msra.mxu0 0
          %970 = vmatprep.mubr.bf16.mxu0 0
          %971 = vmatmul.mubr.bf16.gmra.mxu0 %v933
          %v972 = vpop.f32.mrf.mxu0
          %v973 = vadd.f32 %v728, %v972
          %v974 = vpop.f32.mrf.mxu0
          %v975 = vpop.f32.mrf.mxu0
          %v976 = vadd.f32 %v729, %v975
          %v977 = vpop.f32.mrf.mxu0
          %978 = vdwg.mxu0
          %s979 = scalar_lea.vmem [#allocation2], 16
          %v980 = vld [vmem:[%s979] sm:$0xff]
          %v981 = vld [vmem:[%s979 + $0x8] sm:$0xff]
          %v982 = vsel %vm746, %v973, -inf
          %983 = vmax.xlane.f32.xlu0 %v982
          %v984 = vpop.xlane.xlu0 %983
          %v985 = vsel %vm746, %v976, -inf
          %986 = vmax.xlane.f32.xlu0 %v985
          %v987 = vpop.xlane.xlu0 %986
          %v988 = vmax.f32 %v980, %v984
          %v989 = vmax.f32 %v981, %v987
          %v990 = vsub.f32 %v980, %v988
          %v991 = vsub.f32 %v981, %v989
          %v992 = vmul.f32 %v990, 1.442695
          %v993 = vpow.pop %v992
          %v994 = vmul.f32 %v991, 1.442695
          %v995 = vpow.pop %v994
          %997 = vset.pattern.permute.xlu0 0
          %998 = vperm.xlu0 %997, %v988
          %v999 = vpop.permute.xlu0 %998
          %1002 = vset.pattern.permute.xlu0 0
          %1003 = vperm.xlu0 %1002, %v989
          %v1004 = vpop.permute.xlu0 %1003
          %v1006 = vsub.f32 %v973, %v999
          %v1007 = vsub.f32 %v976, %v1004
          %v1008 = vmul.f32 %v1006, 1.442695
          %v1009 = vpow.pop %v1008
          %v1010 = vmul.f32 %v1007, 1.442695
          %v1011 = vpow.pop %v1010
          %s1012 = scalar_lea.vmem [#allocation3], 16
          %v1013 = vld [vmem:[%s1012] sm:$0xff]
          %v1014 = vld [vmem:[%s1012 + $0x8] sm:$0xff]
          %v1015 = vmul.f32 %v993, %v1013
          %v1016 = vmul.f32 %v995, %v1014
          %v1017 = vsel %vm746, %v1009, 0.0
          %1018 = vadd.xlane.f32.xlu0 %v1017
          %v1019 = vpop.xlane.xlu0 %1018
          %v1020 = vsel %vm746, %v1011, 0.0
          %1021 = vadd.xlane.f32.xlu0 %v1020
          %v1022 = vpop.xlane.xlu0 %1021
          %v1023 = vadd.f32 %v1015, %v1019
          %v1024 = vadd.f32 %v1016, %v1022
          %1025 = vst.msk [vmem:[%s1012] sm:$0xff] %vm838, %v1023
          %1026 = vst.msk [vmem:[%s1012 + $0x8] sm:$0xff] %vm838, %v1024
          %v1027 = vld [vmem:[#allocation4] sm:$0xff]
          %v1028 = vld [vmem:[#allocation4 + $0x8] sm:$0xff]
          %1030 = vset.pattern.permute.xlu0 0
          %1031 = vperm.xlu0 %1030, %v993
          %v1032 = vpop.permute.xlu0 %1031
          %1035 = vset.pattern.permute.xlu0 0
          %1036 = vperm.xlu0 %1035, %v995
          %v1037 = vpop.permute.xlu0 %1036
          %v1039 = vmul.f32 %v1032, %v1027
          %v1040 = vmul.f32 %v1037, %v1028
          %v1041 = vpack.c.bf16 %v1011, %v1009
          %v1044 = vunpack.c.l.b16 %v916
          %v1045 = vunpack.c.l.b16 %v917
          %v1046 = vpack.c.b16 %v1045, %v1044
          %1047 = vrot.lane.b32.xlu0 %v1046, 112
          %v1048 = vpop.permute.xlu0 %1047
          %v1051 = vsel %vm746, %v1041, 0
          %1053 = vmatprep.subr.bf16.mxu0 0
          %1054 = vmatpush1.bf16.msra.mxu0 0
          %1055 = vmatprep.subr.bf16.mxu0 0
          %1056 = vmatpush1.bf16.msra.mxu0 0
          %1057 = vmatprep.subr.bf16.mxu0 0
          %1058 = vmatpush1.bf16.msra.mxu0 0
          %1059 = vmatprep.subr.bf16.mxu0 0
          %1060 = vmatpush1.bf16.msra.mxu0 0
          %1061 = vmatprep.subr.bf16.mxu0 0
          %1062 = vmatpush1.bf16.msra.mxu0 0
          %1063 = vmatprep.subr.bf16.mxu0 0
          %1064 = vmatpush1.bf16.msra.mxu0 0
          %1065 = vmatprep.subr.bf16.mxu0 0
          %1066 = vmatpush1.bf16.msra.mxu0 0
          %1067 = vmatprep.subr.bf16.mxu0 0
          %1068 = vmatpush1.bf16.msra.mxu0 %v1048
          %1069 = vmatprep.subr.bf16.mxu0 0
          %1070 = vmatpush2.bf16.msra.mxu0 0
          %1071 = vmatprep.subr.bf16.mxu0 0
          %1072 = vmatpush2.bf16.msra.mxu0 0
          %1073 = vmatprep.subr.bf16.mxu0 0
          %1074 = vmatpush2.bf16.msra.mxu0 0
          %1075 = vmatprep.subr.bf16.mxu0 0
          %1076 = vmatpush2.bf16.msra.mxu0 0
          %1077 = vmatprep.subr.bf16.mxu0 0
          %1078 = vmatpush2.bf16.msra.mxu0 0
          %1079 = vmatprep.subr.bf16.mxu0 0
          %1080 = vmatpush2.bf16.msra.mxu0 0
          %1081 = vmatprep.subr.bf16.mxu0 0
          %1082 = vmatpush2.bf16.msra.mxu0 0
          %1083 = vmatprep.subr.bf16.mxu0 0
          %1084 = vmatpush2.bf16.msra.mxu0 0
          %1085 = vmatprep.mubr.bf16.mxu0 0
          %1086 = vmatmul.mubr.bf16.gmra.mxu0 %v1051
          %v1087 = vpop.f32.mrf.mxu0
          %v1088 = vadd.f32 0.0, %v1087
          %v1089 = vpop.f32.mrf.mxu0
          %v1090 = vpop.f32.mrf.mxu0
          %v1091 = vadd.f32 0.0, %v1090
          %v1092 = vpop.f32.mrf.mxu0
          %1093 = vdwg.mxu0
          %1096 = vrot.lane.b32.xlu0 %v1088, 16
          %v1097 = vpop.permute.xlu0 %1096
          %1098 = vrot.lane.b32.xlu0 %v1091, 16
          %v1099 = vpop.permute.xlu0 %1098
          %v1102 = vadd.f32 %v1039, %v1097
          %v1103 = vadd.f32 %v1040, %v1099
          %vm1104 = vcmask 261248
          %1105 = vst.msk [vmem:[#allocation4] sm:$0xff] %vm1104, %v1102
          %1106 = vst.msk [vmem:[#allocation4 + $0x8] sm:$0xff] %vm1104, %v1103
          %1107 = vst.msk [vmem:[%s979] sm:$0xff] %vm838, %v988
          %1108 = vst.msk [vmem:[%s979 + $0x8] sm:$0xff] %vm838, %v989
          %v1109 = vld [vmem:[#allocation3] sm:$0xff]
          %v1110 = vld [vmem:[#allocation3 + $0x8] sm:$0xff]
          %v1111 = vrcp.pop %v1109
          %v1112 = vrcp.pop %v1110
          %v1113 = vld [vmem:[#allocation4] sm:$0xff]
          %v1114 = vld [vmem:[#allocation4 + $0x8] sm:$0xff]
          %1116 = vset.pattern.permute.xlu0 0
          %1117 = vperm.xlu0 %1116, %v1111
          %v1118 = vpop.permute.xlu0 %1117
          %1121 = vset.pattern.permute.xlu0 0
          %1122 = vperm.xlu0 %1121, %v1112
          %v1123 = vpop.permute.xlu0 %1122
          %v1125 = vmul.f32 %v1113, %v1118
          %v1126 = vmul.f32 %v1114, %v1123
          %1127 = vst.msk [vmem:[#allocation4] sm:$0xff] %vm746, %v1125
          %1128 = vst.msk [vmem:[#allocation4 + $0x8] sm:$0xff] %vm746, %v1126
          %v1129 = vld [vmem:[%s1012] sm:$0xff]
          %v1130 = vld [vmem:[%s1012 + $0x8] sm:$0xff]
          %v1131 = vrcp.pop %v1129
          %v1132 = vrcp.pop %v1130
          %v1133 = vld [vmem:[#allocation4] sm:$0xff]
          %v1134 = vld [vmem:[#allocation4 + $0x8] sm:$0xff]
          %1136 = vset.pattern.permute.xlu0 0
          %1137 = vperm.xlu0 %1136, %v1131
          %v1138 = vpop.permute.xlu0 %1137
          %1141 = vset.pattern.permute.xlu0 0
          %1142 = vperm.xlu0 %1141, %v1132
          %v1143 = vpop.permute.xlu0 %1142
          %v1145 = vmul.f32 %v1133, %v1138
          %v1146 = vmul.f32 %v1134, %v1143
          %1147 = vst.msk [vmem:[#allocation4] sm:$0xff] %vm1104, %v1145
          %1148 = vst.msk [vmem:[#allocation4 + $0x8] sm:$0xff] %vm1104, %v1146
          %v1149 = vld [vmem:[#allocation4] sm:$0xff]
          %v1150 = vld [vmem:[#allocation4 + $0x8] sm:$0xff]
          %v1151 = vpack.c.bf16 %v1150, %v1149
          %v1153 = vunpack.c.l.b16 %v1151
          %v1154 = vunpack.c.h.b16 %v1151
          %v1155 = vpack.c.b16 %v1153, %v1153
          %v1156 = vpack.c.b16 %v1154, %v1154
          %vm1159 = vcmask 257024
          %1160 = vst.msk [vmem:[%s306] sm:$0xf] %vm1159, %v1155
          %1161 = vst.msk [vmem:[%s306 + $0x4] sm:$0xf] %vm1159, %v1156
        $region56: #{tpu_custom_call.1} parent=31 // pred_fallthru
          _
        %s1162 = sand.u32 %s141, 1
        %s1163 = scalar_lea.sflag [#allocation10], %s1162
        %s1164 = sand.u32 %s141, 1
        %s1165 = smul.addr %s1164, 8
        %s1166 = scalar_lea.vmem [#allocation14], %s1165
        // Predicated region
        $region57: #{tpu_custom_call.1} parent=31 // pred_check
          %p1167 = pneg %p151
        $region58: #{tpu_custom_call.1} parent=31 // pred_check_branch
          %1169 = sbr.rel (%p1167) target = $region60
        $region59: #{tpu_custom_call.1} parent=31 // pred_region
          %s1170 = sld [smem:[#allocation6 + %s32]]
          %s1171 = smul.u32 2, %s1170
          %s1173 = ssub.s32 128, 128
          %1174 = vsyncadd %s1163, %s1173
          %s1175 = smul.addr %s31, 2
          %s1176 = sadd.s32 %s1171, %s1175
          %s1177 = smul.addr %s1176, 64
          %s1178 = scalar_lea.hbm %s5, %s1177
          %s1179 = sshll.u32 %s1166, 4
          %s1180 = int_to_ptr.vmem [resolvable:$true] %s1179
          %1185 = dma.vmem_to_hbm [thread:$0]  %s1180, 128, %s1178, %s1163, 64, 64, 4
        $region60: #{tpu_custom_call.1} parent=31 // pred_fallthru
          _
      $region32: #{tpu_custom_call.1} parent=5 // pred_fallthru
        _
      %p1186 = scmp.le.s32.totalorder 2, %s22
      // Predicated region
      $region61: #{tpu_custom_call.1} parent=5 // pred_check
        %p1187 = pneg %p1186
      $region62: #{tpu_custom_call.1} parent=5 // pred_check_branch
        %1189 = sbr.rel (%p1187) target = $region64
      $region63: #{tpu_custom_call.1} parent=5 // pred_region
        %s1190 = ssub.s32 %s22, 2
        // Predicated region
        $region65: #{tpu_custom_call.1} parent=63 // pred_check
          %p1191 = pneg %p157
        $region66: #{tpu_custom_call.1} parent=63 // pred_check_branch
          %1193 = sbr.rel (%p1191) target = $region68
        $region67: #{tpu_custom_call.1} parent=63 // pred_region
          %s1194 = sand.u32 %s142, 1
          %s1195 = scalar_lea.sflag [#allocation10], %s1194
          %s1196 = sand.u32 %s142, 1
          %s1197 = smul.addr %s1196, 8
          %s1198 = scalar_lea.vmem [#allocation14], %s1197
          %1199 = dma.done %s1195, 128
        $region68: #{tpu_custom_call.1} parent=63 // pred_fallthru
          _
      $region64: #{tpu_custom_call.1} parent=5 // pred_fallthru
        _
    $region6: #{tpu_custom_call.1} parent=1 // loop_footer
      %s26 = sadd.s32 1, %s22
    $region7: #{tpu_custom_call.1} parent=1 // loop_footer_branch
      %21 = sbr.rel target = $region3
    $region8: #{tpu_custom_call.1} parent=1 // loop_exit
      _
    %1200 = vsyncpa [#allocation9], 1
    %s1201 = scalar_lea.sflag [#allocation9], 1
    %1202 = vsyncpa %s1201, 1
    %1203 = vsyncpa [#allocation12], 1
    %s1204 = scalar_lea.sflag [#allocation12], 1
    %1205 = vsyncpa %s1204, 1
    %1206 = vsyncpa [#allocation10], 1
    %s1207 = scalar_lea.sflag [#allocation10], 1
    %1208 = vsyncpa %s1207, 1

</llo_original>
